<compile_context>
chip_gen: v5e
topology: v5e:2x2
jax: 0.10.0
libtpu: 0.0.40
codegen_flags: <defaults>
</compile_context>

<pallas_src>
import functools

import jax
import jax.numpy as jnp
import numpy as np
from jax import lax
from jax.experimental import pallas as pl
from jax.experimental.pallas import tpu as pltpu


# --------------------------------------------------------------------------------------
# Parameter folding / packing (runs ONCE, outside jit, on concrete params)
# --------------------------------------------------------------------------------------
def _tap_masks(H, W):
    """(9, H*W) float32 validity masks for the 3x3 taps of a pad=1 convolution."""
    hh = np.arange(H)[:, None]
    ww = np.arange(W)[None, :]
    rows = []
    for di in range(3):
        for dj in range(3):
            valid = ((hh + di - 1 >= 0) & (hh + di - 1 < H) &
                     (ww + dj - 1 >= 0) & (ww + dj - 1 < W))
            rows.append(valid.reshape(-1))
    return np.stack(rows).astype(np.float32)            # (9, H*W)


def pack_block2_params(params, H, W):
    """Fold boundary masks into the depthwise weights and pack the pointwise params.

    Returns (alphas (S,), mw tuple of (9, Cin_s, HW), wtb (S, Cout_max, Cin_max+1),
    stage_dims tuple of (cin, cout))."""
    masks = _tap_masks(H, W)                              # (9, HW)
    stage_dims = tuple((int(p["wt"].shape[1]), int(p["wt"].shape[0])) for p in params)
    cin_max = max(c for c, _ in stage_dims)
    cout_max = max(c for _, c in stage_dims)
    width = cin_max + 1                                   # last column holds the bias

    mw_list = []
    wtb = np.zeros((len(params), cout_max, width), np.float32)
    for s, p in enumerate(params):
        cin, cout = stage_dims[s]
        wdw_t = np.asarray(p["wdw_t"], np.float32)        # (cin, 9)
        # mw[tap, c, :] = mask[tap, :] * wdw[c, tap]  ->  (9, cin, HW)
        mw = masks[:, None, :] * wdw_t.T[:, :, None]
        mw_list.append(jnp.asarray(mw))
        wtb[s, :cout, :cin] = np.asarray(p["wt"], np.float32)
        wtb[s, :cout, width - 1] = np.asarray(p["bias"], np.float32)[:, 0]

    alphas = jnp.asarray(np.stack([np.float32(p["alpha"]) for p in params]))
    return alphas, tuple(mw_list), jnp.asarray(wtb), stage_dims


def _dual_tensorcore():
    """True on chips with 2 TensorCores per chip (v7x) -> keep the batch grid split."""
    try:
        kind = jax.devices()[0].device_kind.lower()
    except Exception:
        return False
    return ("v7" in kind) or ("7x" in kind)


# --------------------------------------------------------------------------------------
# Fused kernel
# --------------------------------------------------------------------------------------
def _block2_kernel(*refs, nb, W, HW, stage_dims):
    alpha_ref, x_ref = refs[0], refs[1]
    n_stages = len(stage_dims)
    mw_refs = refs[2:2 + n_stages]                        # (9, Cin_s, HW) per stage
    wtb_ref = refs[2 + n_stages]                          # (S, Cout_max, Cin_max+1)
    o_ref = refs[-1]
    width = wtb_ref.shape[-1]

    for i in range(nb):                                   # images in this grid step (unrolled)
        a = x_ref[i]                                      # (Cin0, HW), spatial on lanes
        for s, (cin, cout) in enumerate(stage_dims):
            mw_ref = mw_refs[s]
            # Depthwise 3x3 (pad=1): static lane rotations (XLU) x pre-masked weights (VPU).
            dw = a * mw_ref[4]                            # center tap (no shift, mask==1)
            for di in range(3):
                for dj in range(3):
                    if di == 1 and dj == 1:
                        continue
                    tap = di * 3 + dj
                    off = (di - 1) * W + (dj - 1)         # flat spatial offset of this tap
                    rolled = pltpu.roll(a, shift=(-off) % HW, axis=1)
                    dw = dw + rolled * mw_ref[tap]
            # Pointwise 1x1 conv + folded BatchNorm + all biases: one MXU matmul.
            wtb = wtb_ref[s]                              # (Cout_max, Cin_max+1)
            y = jnp.dot(wtb[:cout, :cin], dw, preferred_element_type=jnp.float32)
            y = y + wtb[:cout, width - 1:width]
            # PReLU (single shared alpha, PyTorch default).
            a = jnp.where(y >= 0.0, y, alpha_ref[s] * y)
        o_ref[i] = a                                      # unmasked lane-dense store


def block2_pallas(x_nchw, alphas, mw, wtb, *, stage_dims, H, W, images_per_step):
    """block2 forward. x_nchw: (B, Cin, H, W) as in PyTorch. Returns (B, Cout, H, W)."""
    B, Cin, _, _ = x_nchw.shape
    HW = H * W
    cout_last = stage_dims[-1][1]
    nb = images_per_step
    assert B % nb == 0

    x2 = x_nchw.reshape(B, Cin, HW).astype(jnp.float32)   # no transpose; spatial on lanes

    kernel = functools.partial(_block2_kernel, nb=nb, W=W, HW=HW, stage_dims=stage_dims)

    in_specs = [
        pl.BlockSpec(memory_space=pltpu.MemorySpace.SMEM),            # PReLU alphas
        pl.BlockSpec((nb, Cin, HW), lambda g: (g, 0, 0)),             # input activations
    ]
    for m in mw:
        in_specs.append(pl.BlockSpec(m.shape, lambda g: (0, 0, 0)))   # masked dw weights
    in_specs.append(pl.BlockSpec(wtb.shape, lambda g: (0, 0, 0)))     # packed pw weights+bias

    out = pl.pallas_call(
        kernel,
        out_shape=jax.ShapeDtypeStruct((B, cout_last, HW), jnp.float32),
        grid=(B // nb,),
        in_specs=in_specs,
        out_specs=pl.BlockSpec((nb, cout_last, HW), lambda g: (g, 0, 0)),
        compiler_params=pltpu.CompilerParams(
            dimension_semantics=("parallel",)),           # shards batch across 2 TCs on v7x
    )(alphas, x2, *mw, wtb)
    return out.reshape(B, cout_last, H, W)


# --------------------------------------------------------------------------------------
# Synthetic params (deterministic) + pure-JAX reference
# --------------------------------------------------------------------------------------
def init_dsc_params(key, cin, cout):
    """Deterministic synthetic params for one dsc module (+ folded kernel params)."""
    ks = jax.random.split(key, 8)
    wdw = jax.random.normal(ks[0], (3, 3, cin), jnp.float32) * 0.2    # depthwise 3x3
    bdw = jax.random.normal(ks[1], (cin,), jnp.float32) * 0.05
    wpw = jax.random.normal(ks[2], (cin, cout), jnp.float32) * (1.0 / np.sqrt(cin))
    bpw = jax.random.normal(ks[3], (cout,), jnp.float32) * 0.05
    gamma = 1.0 + 0.1 * jax.random.normal(ks[4], (cout,), jnp.float32)
    beta = 0.1 * jax.random.normal(ks[5], (cout,), jnp.float32)
    rmean = 0.1 * jax.random.normal(ks[6], (cout,), jnp.float32)
    rvar = jnp.abs(1.0 + 0.1 * jax.random.normal(ks[7], (cout,), jnp.float32))
    alpha = jnp.float32(0.25)                                          # PReLU default init
    eps = 1e-5
    scale = gamma / jnp.sqrt(rvar + eps)
    shift = beta - rmean * scale
    # Folded params for the fused Pallas kernel (exact algebraic folding, still f32):
    wdw_t = wdw.reshape(9, cin).T                                      # (cin, 9)
    wt = (wpw * scale[None, :]).T                                      # (cout, cin)
    bias = (scale * (bpw + bdw @ wpw) + shift)[:, None]                # (cout, 1)
    return dict(wdw=wdw, bdw=bdw, wpw=wpw, bpw=bpw, scale=scale, shift=shift,
                alpha=alpha, wdw_t=wdw_t, wt=wt, bias=bias)


def _dsc_ref(x_nhwc, p):
    cin = x_nhwc.shape[-1]
    dw_w = p["wdw"][:, :, None, :]                                     # (3,3,1,Cin) HWIO
    dw = lax.conv_general_dilated(
        x_nhwc, dw_w, window_strides=(1, 1), padding=((1, 1), (1, 1)),
        dimension_numbers=("NHWC", "HWIO", "NHWC"), feature_group_count=cin)
    dw = dw + p["bdw"]
    pw = jnp.einsum("bhwc,cd->bhwd", dw, p["wpw"]) + p["bpw"]
    y = pw * p["scale"] + p["shift"]
    return jnp.where(y >= 0, y, p["alpha"] * y)


def block2_ref(x_nchw, params):
    x = jnp.transpose(x_nchw, (0, 2, 3, 1)).astype(jnp.float32)
    for p in params:
        x = _dsc_ref(x, p)
    return jnp.transpose(x, (0, 3, 1, 2))


if __name__ == "__main__":
    key = jax.random.PRNGKey(0)
    k_x, k1, k2, k3 = jax.random.split(key, 4)

    B, Cin, H, W = 2, 4, 16, 16
    x = jax.random.normal(k_x, (B, Cin, H, W), jnp.float32)

    params = [
        init_dsc_params(k1, Cin, 12),   # conv1: in -> 12
        init_dsc_params(k2, 12, 12),    # conv2: 12 -> 12
        init_dsc_params(k3, 12, 48),    # conv3: 12 -> 48
    ]

    # One-time packing / folding (outside jit, so no per-call wrapper XLA ops).
    alphas, mw, wtb, stage_dims = pack_block2_params(params, H, W)
    # Dual-TC (v7x): one image per grid step, parallel across cores.
    # Single-TC (v5e/v6e): collapse the batch into one grid step.
    nb = 1 if (_dual_tensorcore() and B > 1) else B

    fwd = jax.jit(functools.partial(
        block2_pallas, stage_dims=stage_dims, H=H, W=W, images_per_step=nb))
    out = jax.block_until_ready(fwd(x, alphas, mw, wtb))
    assert out.shape == (B, 48, H, W), out.shape

    ref = jax.block_until_ready(block2_ref(x, params))
    np.testing.assert_allclose(np.asarray(out), np.asarray(ref), rtol=1e-4, atol=1e-4)

    print("KERNEL_OK")
</pallas_src>

<mosaic_0001>
module attributes {stable_mosaic.version = 11 : i64} {
  func.func @_block2_kernel(%arg0: i32, %arg1: memref<3xf32, #tpu.memory_space<smem>>, %arg2: memref<2x4x256xf32, #tpu.memory_space<vmem>>, %arg3: memref<9x4x256xf32, #tpu.memory_space<vmem>>, %arg4: memref<9x12x256xf32, #tpu.memory_space<vmem>>, %arg5: memref<9x12x256xf32, #tpu.memory_space<vmem>>, %arg6: memref<3x48x13xf32, #tpu.memory_space<vmem>>, %arg7: memref<2x48x256xf32, #tpu.memory_space<vmem>>) attributes {dimension_semantics = [#tpu.dimension_semantics<parallel>], iteration_bounds = array<i64: 1>, scalar_prefetch = 0 : i64, scratch_operands = 0 : i64, tpu.core_type = #tpu.core_type<tc>, window_params = [{transform_indices = @transform_0, window_bounds = array<i64: 3>}, {transform_indices = @transform_1, window_bounds = array<i64: 2, 4, 256>}, {pipeline_mode = #tpu.pipeline_mode<synchronous>, transform_indices = @transform_2, window_bounds = array<i64: 9, 4, 256>}, {pipeline_mode = #tpu.pipeline_mode<synchronous>, transform_indices = @transform_3, window_bounds = array<i64: 9, 12, 256>}, {pipeline_mode = #tpu.pipeline_mode<synchronous>, transform_indices = @transform_4, window_bounds = array<i64: 9, 12, 256>}, {pipeline_mode = #tpu.pipeline_mode<synchronous>, transform_indices = @transform_5, window_bounds = array<i64: 3, 48, 13>}, {transform_indices = @transform_6, window_bounds = array<i64: 2, 48, 256>}]} {
    %c0 = arith.constant 0 : index
    %c0_0 = arith.constant 0 : index
    %c0_1 = arith.constant 0 : index
    %0 = vector.load %arg2[%c0, %c0_0, %c0_1] : memref<2x4x256xf32, #tpu.memory_space<vmem>>, vector<1x4x256xf32>
    %1 = vector.shape_cast %0 : vector<1x4x256xf32> to vector<4x256xf32>
    %c4 = arith.constant 4 : index
    %c0_2 = arith.constant 0 : index
    %c0_3 = arith.constant 0 : index
    %2 = vector.load %arg3[%c4, %c0_2, %c0_3] : memref<9x4x256xf32, #tpu.memory_space<vmem>>, vector<1x4x256xf32>
    %3 = vector.shape_cast %2 : vector<1x4x256xf32> to vector<4x256xf32>
    %4 = arith.mulf %1, %3 : vector<4x256xf32>
    %c17_i32 = arith.constant 17 : i32
    %5 = tpu.dynamic_rotate %1 by %c17_i32 dim 1 : vector<4x256xf32>, i32 -> vector<4x256xf32>
    %c0_4 = arith.constant 0 : index
    %c0_5 = arith.constant 0 : index
    %c0_6 = arith.constant 0 : index
    %6 = vector.load %arg3[%c0_4, %c0_5, %c0_6] : memref<9x4x256xf32, #tpu.memory_space<vmem>>, vector<1x4x256xf32>
    %7 = vector.shape_cast %6 : vector<1x4x256xf32> to vector<4x256xf32>
    %8 = arith.mulf %5, %7 : vector<4x256xf32>
    %9 = arith.addf %4, %8 : vector<4x256xf32>
    %c16_i32 = arith.constant 16 : i32
    %10 = tpu.dynamic_rotate %1 by %c16_i32 dim 1 : vector<4x256xf32>, i32 -> vector<4x256xf32>
    %c1 = arith.constant 1 : index
    %c0_7 = arith.constant 0 : index
    %c0_8 = arith.constant 0 : index
    %11 = vector.load %arg3[%c1, %c0_7, %c0_8] : memref<9x4x256xf32, #tpu.memory_space<vmem>>, vector<1x4x256xf32>
    %12 = vector.shape_cast %11 : vector<1x4x256xf32> to vector<4x256xf32>
    %13 = arith.mulf %10, %12 : vector<4x256xf32>
    %14 = arith.addf %9, %13 : vector<4x256xf32>
    %c15_i32 = arith.constant 15 : i32
    %15 = tpu.dynamic_rotate %1 by %c15_i32 dim 1 : vector<4x256xf32>, i32 -> vector<4x256xf32>
    %c2 = arith.constant 2 : index
    %c0_9 = arith.constant 0 : index
    %c0_10 = arith.constant 0 : index
    %16 = vector.load %arg3[%c2, %c0_9, %c0_10] : memref<9x4x256xf32, #tpu.memory_space<vmem>>, vector<1x4x256xf32>
    %17 = vector.shape_cast %16 : vector<1x4x256xf32> to vector<4x256xf32>
    %18 = arith.mulf %15, %17 : vector<4x256xf32>
    %19 = arith.addf %14, %18 : vector<4x256xf32>
    %c1_i32 = arith.constant 1 : i32
    %20 = tpu.dynamic_rotate %1 by %c1_i32 dim 1 : vector<4x256xf32>, i32 -> vector<4x256xf32>
    %c3 = arith.constant 3 : index
    %c0_11 = arith.constant 0 : index
    %c0_12 = arith.constant 0 : index
    %21 = vector.load %arg3[%c3, %c0_11, %c0_12] : memref<9x4x256xf32, #tpu.memory_space<vmem>>, vector<1x4x256xf32>
    %22 = vector.shape_cast %21 : vector<1x4x256xf32> to vector<4x256xf32>
    %23 = arith.mulf %20, %22 : vector<4x256xf32>
    %24 = arith.addf %19, %23 : vector<4x256xf32>
    %c255_i32 = arith.constant 255 : i32
    %25 = tpu.dynamic_rotate %1 by %c255_i32 dim 1 : vector<4x256xf32>, i32 -> vector<4x256xf32>
    %c5 = arith.constant 5 : index
    %c0_13 = arith.constant 0 : index
    %c0_14 = arith.constant 0 : index
    %26 = vector.load %arg3[%c5, %c0_13, %c0_14] : memref<9x4x256xf32, #tpu.memory_space<vmem>>, vector<1x4x256xf32>
    %27 = vector.shape_cast %26 : vector<1x4x256xf32> to vector<4x256xf32>
    %28 = arith.mulf %25, %27 : vector<4x256xf32>
    %29 = arith.addf %24, %28 : vector<4x256xf32>
    %c241_i32 = arith.constant 241 : i32
    %30 = tpu.dynamic_rotate %1 by %c241_i32 dim 1 : vector<4x256xf32>, i32 -> vector<4x256xf32>
    %c6 = arith.constant 6 : index
    %c0_15 = arith.constant 0 : index
    %c0_16 = arith.constant 0 : index
    %31 = vector.load %arg3[%c6, %c0_15, %c0_16] : memref<9x4x256xf32, #tpu.memory_space<vmem>>, vector<1x4x256xf32>
    %32 = vector.shape_cast %31 : vector<1x4x256xf32> to vector<4x256xf32>
    %33 = arith.mulf %30, %32 : vector<4x256xf32>
    %34 = arith.addf %29, %33 : vector<4x256xf32>
    %c240_i32 = arith.constant 240 : i32
    %35 = tpu.dynamic_rotate %1 by %c240_i32 dim 1 : vector<4x256xf32>, i32 -> vector<4x256xf32>
    %c7 = arith.constant 7 : index
    %c0_17 = arith.constant 0 : index
    %c0_18 = arith.constant 0 : index
    %36 = vector.load %arg3[%c7, %c0_17, %c0_18] : memref<9x4x256xf32, #tpu.memory_space<vmem>>, vector<1x4x256xf32>
    %37 = vector.shape_cast %36 : vector<1x4x256xf32> to vector<4x256xf32>
    %38 = arith.mulf %35, %37 : vector<4x256xf32>
    %39 = arith.addf %34, %38 : vector<4x256xf32>
    %c239_i32 = arith.constant 239 : i32
    %40 = tpu.dynamic_rotate %1 by %c239_i32 dim 1 : vector<4x256xf32>, i32 -> vector<4x256xf32>
    %c8 = arith.constant 8 : index
    %c0_19 = arith.constant 0 : index
    %c0_20 = arith.constant 0 : index
    %41 = vector.load %arg3[%c8, %c0_19, %c0_20] : memref<9x4x256xf32, #tpu.memory_space<vmem>>, vector<1x4x256xf32>
    %42 = vector.shape_cast %41 : vector<1x4x256xf32> to vector<4x256xf32>
    %43 = arith.mulf %40, %42 : vector<4x256xf32>
    %44 = arith.addf %39, %43 : vector<4x256xf32>
    %c0_21 = arith.constant 0 : index
    %c0_22 = arith.constant 0 : index
    %c0_23 = arith.constant 0 : index
    %45 = vector.load %arg6[%c0_21, %c0_22, %c0_23] : memref<3x48x13xf32, #tpu.memory_space<vmem>>, vector<1x48x13xf32>
    %46 = vector.shape_cast %45 : vector<1x48x13xf32> to vector<48x13xf32>
    %47 = vector.extract_strided_slice %46 {offsets = [0, 0], sizes = [12, 4], strides = [1, 1]} : vector<48x13xf32> to vector<12x4xf32>
    %cst = arith.constant dense<0.000000e+00> : vector<12x256xf32>
    %48 = tpu.matmul %47, %44, %cst {dimension_numbers = #tpu.dot_dimension_numbers<[1], [0], [0], [1], [0, 0, 1, 1], [], []>} : vector<12x4xf32>, vector<4x256xf32>, vector<12x256xf32> -> vector<12x256xf32>
    %49 = vector.extract_strided_slice %46 {offsets = [0, 12], sizes = [12, 1], strides = [1, 1]} : vector<48x13xf32> to vector<12x1xf32>
    %50 = vector.broadcast %49 : vector<12x1xf32> to vector<12x256xf32>
    %51 = arith.addf %48, %50 : vector<12x256xf32>
    %cst_24 = arith.constant 0.000000e+00 : f32
    %52 = vector.broadcast %cst_24 : f32 to vector<12x256xf32>
    %53 = arith.cmpf oge, %51, %52 : vector<12x256xf32>
    %c0_25 = arith.constant 0 : index
    %54 = memref.load %arg1[%c0_25] : memref<3xf32, #tpu.memory_space<smem>>
    %55 = vector.broadcast %54 : f32 to vector<12x256xf32>
    %56 = arith.mulf %55, %51 : vector<12x256xf32>
    %57 = arith.select %53, %51, %56 : vector<12x256xi1>, vector<12x256xf32>
    %c4_26 = arith.constant 4 : index
    %c0_27 = arith.constant 0 : index
    %c0_28 = arith.constant 0 : index
    %58 = vector.load %arg4[%c4_26, %c0_27, %c0_28] : memref<9x12x256xf32, #tpu.memory_space<vmem>>, vector<1x12x256xf32>
    %59 = vector.shape_cast %58 : vector<1x12x256xf32> to vector<12x256xf32>
    %60 = arith.mulf %57, %59 : vector<12x256xf32>
    %c17_i32_29 = arith.constant 17 : i32
    %61 = tpu.dynamic_rotate %57 by %c17_i32_29 dim 1 : vector<12x256xf32>, i32 -> vector<12x256xf32>
    %c0_30 = arith.constant 0 : index
    %c0_31 = arith.constant 0 : index
    %c0_32 = arith.constant 0 : index
    %62 = vector.load %arg4[%c0_30, %c0_31, %c0_32] : memref<9x12x256xf32, #tpu.memory_space<vmem>>, vector<1x12x256xf32>
    %63 = vector.shape_cast %62 : vector<1x12x256xf32> to vector<12x256xf32>
    %64 = arith.mulf %61, %63 : vector<12x256xf32>
    %65 = arith.addf %60, %64 : vector<12x256xf32>
    %c16_i32_33 = arith.constant 16 : i32
    %66 = tpu.dynamic_rotate %57 by %c16_i32_33 dim 1 : vector<12x256xf32>, i32 -> vector<12x256xf32>
    %c1_34 = arith.constant 1 : index
    %c0_35 = arith.constant 0 : index
    %c0_36 = arith.constant 0 : index
    %67 = vector.load %arg4[%c1_34, %c0_35, %c0_36] : memref<9x12x256xf32, #tpu.memory_space<vmem>>, vector<1x12x256xf32>
    %68 = vector.shape_cast %67 : vector<1x12x256xf32> to vector<12x256xf32>
    %69 = arith.mulf %66, %68 : vector<12x256xf32>
    %70 = arith.addf %65, %69 : vector<12x256xf32>
    %c15_i32_37 = arith.constant 15 : i32
    %71 = tpu.dynamic_rotate %57 by %c15_i32_37 dim 1 : vector<12x256xf32>, i32 -> vector<12x256xf32>
    %c2_38 = arith.constant 2 : index
    %c0_39 = arith.constant 0 : index
    %c0_40 = arith.constant 0 : index
    %72 = vector.load %arg4[%c2_38, %c0_39, %c0_40] : memref<9x12x256xf32, #tpu.memory_space<vmem>>, vector<1x12x256xf32>
    %73 = vector.shape_cast %72 : vector<1x12x256xf32> to vector<12x256xf32>
    %74 = arith.mulf %71, %73 : vector<12x256xf32>
    %75 = arith.addf %70, %74 : vector<12x256xf32>
    %c1_i32_41 = arith.constant 1 : i32
    %76 = tpu.dynamic_rotate %57 by %c1_i32_41 dim 1 : vector<12x256xf32>, i32 -> vector<12x256xf32>
    %c3_42 = arith.constant 3 : index
    %c0_43 = arith.constant 0 : index
    %c0_44 = arith.constant 0 : index
    %77 = vector.load %arg4[%c3_42, %c0_43, %c0_44] : memref<9x12x256xf32, #tpu.memory_space<vmem>>, vector<1x12x256xf32>
    %78 = vector.shape_cast %77 : vector<1x12x256xf32> to vector<12x256xf32>
    %79 = arith.mulf %76, %78 : vector<12x256xf32>
    %80 = arith.addf %75, %79 : vector<12x256xf32>
    %c255_i32_45 = arith.constant 255 : i32
    %81 = tpu.dynamic_rotate %57 by %c255_i32_45 dim 1 : vector<12x256xf32>, i32 -> vector<12x256xf32>
    %c5_46 = arith.constant 5 : index
    %c0_47 = arith.constant 0 : index
    %c0_48 = arith.constant 0 : index
    %82 = vector.load %arg4[%c5_46, %c0_47, %c0_48] : memref<9x12x256xf32, #tpu.memory_space<vmem>>, vector<1x12x256xf32>
    %83 = vector.shape_cast %82 : vector<1x12x256xf32> to vector<12x256xf32>
    %84 = arith.mulf %81, %83 : vector<12x256xf32>
    %85 = arith.addf %80, %84 : vector<12x256xf32>
    %c241_i32_49 = arith.constant 241 : i32
    %86 = tpu.dynamic_rotate %57 by %c241_i32_49 dim 1 : vector<12x256xf32>, i32 -> vector<12x256xf32>
    %c6_50 = arith.constant 6 : index
    %c0_51 = arith.constant 0 : index
    %c0_52 = arith.constant 0 : index
    %87 = vector.load %arg4[%c6_50, %c0_51, %c0_52] : memref<9x12x256xf32, #tpu.memory_space<vmem>>, vector<1x12x256xf32>
    %88 = vector.shape_cast %87 : vector<1x12x256xf32> to vector<12x256xf32>
    %89 = arith.mulf %86, %88 : vector<12x256xf32>
    %90 = arith.addf %85, %89 : vector<12x256xf32>
    %c240_i32_53 = arith.constant 240 : i32
    %91 = tpu.dynamic_rotate %57 by %c240_i32_53 dim 1 : vector<12x256xf32>, i32 -> vector<12x256xf32>
    %c7_54 = arith.constant 7 : index
    %c0_55 = arith.constant 0 : index
    %c0_56 = arith.constant 0 : index
    %92 = vector.load %arg4[%c7_54, %c0_55, %c0_56] : memref<9x12x256xf32, #tpu.memory_space<vmem>>, vector<1x12x256xf32>
    %93 = vector.shape_cast %92 : vector<1x12x256xf32> to vector<12x256xf32>
    %94 = arith.mulf %91, %93 : vector<12x256xf32>
    %95 = arith.addf %90, %94 : vector<12x256xf32>
    %c239_i32_57 = arith.constant 239 : i32
    %96 = tpu.dynamic_rotate %57 by %c239_i32_57 dim 1 : vector<12x256xf32>, i32 -> vector<12x256xf32>
    %c8_58 = arith.constant 8 : index
    %c0_59 = arith.constant 0 : index
    %c0_60 = arith.constant 0 : index
    %97 = vector.load %arg4[%c8_58, %c0_59, %c0_60] : memref<9x12x256xf32, #tpu.memory_space<vmem>>, vector<1x12x256xf32>
    %98 = vector.shape_cast %97 : vector<1x12x256xf32> to vector<12x256xf32>
    %99 = arith.mulf %96, %98 : vector<12x256xf32>
    %100 = arith.addf %95, %99 : vector<12x256xf32>
    %c1_61 = arith.constant 1 : index
    %c0_62 = arith.constant 0 : index
    %c0_63 = arith.constant 0 : index
    %101 = vector.load %arg6[%c1_61, %c0_62, %c0_63] : memref<3x48x13xf32, #tpu.memory_space<vmem>>, vector<1x48x13xf32>
    %102 = vector.shape_cast %101 : vector<1x48x13xf32> to vector<48x13xf32>
    %103 = vector.extract_strided_slice %102 {offsets = [0, 0], sizes = [12, 12], strides = [1, 1]} : vector<48x13xf32> to vector<12x12xf32>
    %cst_64 = arith.constant dense<0.000000e+00> : vector<12x256xf32>
    %104 = tpu.matmul %103, %100, %cst_64 {dimension_numbers = #tpu.dot_dimension_numbers<[1], [0], [0], [1], [0, 0, 1, 1], [], []>} : vector<12x12xf32>, vector<12x256xf32>, vector<12x256xf32> -> vector<12x256xf32>
    %105 = vector.extract_strided_slice %102 {offsets = [0, 12], sizes = [12, 1], strides = [1, 1]} : vector<48x13xf32> to vector<12x1xf32>
    %106 = vector.broadcast %105 : vector<12x1xf32> to vector<12x256xf32>
    %107 = arith.addf %104, %106 : vector<12x256xf32>
    %cst_65 = arith.constant 0.000000e+00 : f32
    %108 = vector.broadcast %cst_65 : f32 to vector<12x256xf32>
    %109 = arith.cmpf oge, %107, %108 : vector<12x256xf32>
    %c1_66 = arith.constant 1 : index
    %110 = memref.load %arg1[%c1_66] : memref<3xf32, #tpu.memory_space<smem>>
    %111 = vector.broadcast %110 : f32 to vector<12x256xf32>
    %112 = arith.mulf %111, %107 : vector<12x256xf32>
    %113 = arith.select %109, %107, %112 : vector<12x256xi1>, vector<12x256xf32>
    %c4_67 = arith.constant 4 : index
    %c0_68 = arith.constant 0 : index
    %c0_69 = arith.constant 0 : index
    %114 = vector.load %arg5[%c4_67, %c0_68, %c0_69] : memref<9x12x256xf32, #tpu.memory_space<vmem>>, vector<1x12x256xf32>
    %115 = vector.shape_cast %114 : vector<1x12x256xf32> to vector<12x256xf32>
    %116 = arith.mulf %113, %115 : vector<12x256xf32>
    %c17_i32_70 = arith.constant 17 : i32
    %117 = tpu.dynamic_rotate %113 by %c17_i32_70 dim 1 : vector<12x256xf32>, i32 -> vector<12x256xf32>
    %c0_71 = arith.constant 0 : index
    %c0_72 = arith.constant 0 : index
    %c0_73 = arith.constant 0 : index
    %118 = vector.load %arg5[%c0_71, %c0_72, %c0_73] : memref<9x12x256xf32, #tpu.memory_space<vmem>>, vector<1x12x256xf32>
    %119 = vector.shape_cast %118 : vector<1x12x256xf32> to vector<12x256xf32>
    %120 = arith.mulf %117, %119 : vector<12x256xf32>
    %121 = arith.addf %116, %120 : vector<12x256xf32>
    %c16_i32_74 = arith.constant 16 : i32
    %122 = tpu.dynamic_rotate %113 by %c16_i32_74 dim 1 : vector<12x256xf32>, i32 -> vector<12x256xf32>
    %c1_75 = arith.constant 1 : index
    %c0_76 = arith.constant 0 : index
    %c0_77 = arith.constant 0 : index
    %123 = vector.load %arg5[%c1_75, %c0_76, %c0_77] : memref<9x12x256xf32, #tpu.memory_space<vmem>>, vector<1x12x256xf32>
    %124 = vector.shape_cast %123 : vector<1x12x256xf32> to vector<12x256xf32>
    %125 = arith.mulf %122, %124 : vector<12x256xf32>
    %126 = arith.addf %121, %125 : vector<12x256xf32>
    %c15_i32_78 = arith.constant 15 : i32
    %127 = tpu.dynamic_rotate %113 by %c15_i32_78 dim 1 : vector<12x256xf32>, i32 -> vector<12x256xf32>
    %c2_79 = arith.constant 2 : index
    %c0_80 = arith.constant 0 : index
    %c0_81 = arith.constant 0 : index
    %128 = vector.load %arg5[%c2_79, %c0_80, %c0_81] : memref<9x12x256xf32, #tpu.memory_space<vmem>>, vector<1x12x256xf32>
    %129 = vector.shape_cast %128 : vector<1x12x256xf32> to vector<12x256xf32>
    %130 = arith.mulf %127, %129 : vector<12x256xf32>
    %131 = arith.addf %126, %130 : vector<12x256xf32>
    %c1_i32_82 = arith.constant 1 : i32
    %132 = tpu.dynamic_rotate %113 by %c1_i32_82 dim 1 : vector<12x256xf32>, i32 -> vector<12x256xf32>
    %c3_83 = arith.constant 3 : index
    %c0_84 = arith.constant 0 : index
    %c0_85 = arith.constant 0 : index
    %133 = vector.load %arg5[%c3_83, %c0_84, %c0_85] : memref<9x12x256xf32, #tpu.memory_space<vmem>>, vector<1x12x256xf32>
    %134 = vector.shape_cast %133 : vector<1x12x256xf32> to vector<12x256xf32>
    %135 = arith.mulf %132, %134 : vector<12x256xf32>
    %136 = arith.addf %131, %135 : vector<12x256xf32>
    %c255_i32_86 = arith.constant 255 : i32
    %137 = tpu.dynamic_rotate %113 by %c255_i32_86 dim 1 : vector<12x256xf32>, i32 -> vector<12x256xf32>
    %c5_87 = arith.constant 5 : index
    %c0_88 = arith.constant 0 : index
    %c0_89 = arith.constant 0 : index
    %138 = vector.load %arg5[%c5_87, %c0_88, %c0_89] : memref<9x12x256xf32, #tpu.memory_space<vmem>>, vector<1x12x256xf32>
    %139 = vector.shape_cast %138 : vector<1x12x256xf32> to vector<12x256xf32>
    %140 = arith.mulf %137, %139 : vector<12x256xf32>
    %141 = arith.addf %136, %140 : vector<12x256xf32>
    %c241_i32_90 = arith.constant 241 : i32
    %142 = tpu.dynamic_rotate %113 by %c241_i32_90 dim 1 : vector<12x256xf32>, i32 -> vector<12x256xf32>
    %c6_91 = arith.constant 6 : index
    %c0_92 = arith.constant 0 : index
    %c0_93 = arith.constant 0 : index
    %143 = vector.load %arg5[%c6_91, %c0_92, %c0_93] : memref<9x12x256xf32, #tpu.memory_space<vmem>>, vector<1x12x256xf32>
    %144 = vector.shape_cast %143 : vector<1x12x256xf32> to vector<12x256xf32>
    %145 = arith.mulf %142, %144 : vector<12x256xf32>
    %146 = arith.addf %141, %145 : vector<12x256xf32>
    %c240_i32_94 = arith.constant 240 : i32
    %147 = tpu.dynamic_rotate %113 by %c240_i32_94 dim 1 : vector<12x256xf32>, i32 -> vector<12x256xf32>
    %c7_95 = arith.constant 7 : index
    %c0_96 = arith.constant 0 : index
    %c0_97 = arith.constant 0 : index
    %148 = vector.load %arg5[%c7_95, %c0_96, %c0_97] : memref<9x12x256xf32, #tpu.memory_space<vmem>>, vector<1x12x256xf32>
    %149 = vector.shape_cast %148 : vector<1x12x256xf32> to vector<12x256xf32>
    %150 = arith.mulf %147, %149 : vector<12x256xf32>
    %151 = arith.addf %146, %150 : vector<12x256xf32>
    %c239_i32_98 = arith.constant 239 : i32
    %152 = tpu.dynamic_rotate %113 by %c239_i32_98 dim 1 : vector<12x256xf32>, i32 -> vector<12x256xf32>
    %c8_99 = arith.constant 8 : index
    %c0_100 = arith.constant 0 : index
    %c0_101 = arith.constant 0 : index
    %153 = vector.load %arg5[%c8_99, %c0_100, %c0_101] : memref<9x12x256xf32, #tpu.memory_space<vmem>>, vector<1x12x256xf32>
    %154 = vector.shape_cast %153 : vector<1x12x256xf32> to vector<12x256xf32>
    %155 = arith.mulf %152, %154 : vector<12x256xf32>
    %156 = arith.addf %151, %155 : vector<12x256xf32>
    %c2_102 = arith.constant 2 : index
    %c0_103 = arith.constant 0 : index
    %c0_104 = arith.constant 0 : index
    %157 = vector.load %arg6[%c2_102, %c0_103, %c0_104] : memref<3x48x13xf32, #tpu.memory_space<vmem>>, vector<1x48x13xf32>
    %158 = vector.shape_cast %157 : vector<1x48x13xf32> to vector<48x13xf32>
    %159 = vector.extract_strided_slice %158 {offsets = [0, 0], sizes = [48, 12], strides = [1, 1]} : vector<48x13xf32> to vector<48x12xf32>
    %cst_105 = arith.constant dense<0.000000e+00> : vector<48x256xf32>
    %160 = tpu.matmul %159, %156, %cst_105 {dimension_numbers = #tpu.dot_dimension_numbers<[1], [0], [0], [1], [0, 0, 1, 1], [], []>} : vector<48x12xf32>, vector<12x256xf32>, vector<48x256xf32> -> vector<48x256xf32>
    %161 = vector.extract_strided_slice %158 {offsets = [0, 12], sizes = [48, 1], strides = [1, 1]} : vector<48x13xf32> to vector<48x1xf32>
    %162 = vector.broadcast %161 : vector<48x1xf32> to vector<48x256xf32>
    %163 = arith.addf %160, %162 : vector<48x256xf32>
    %cst_106 = arith.constant 0.000000e+00 : f32
    %164 = vector.broadcast %cst_106 : f32 to vector<48x256xf32>
    %165 = arith.cmpf oge, %163, %164 : vector<48x256xf32>
    %c2_107 = arith.constant 2 : index
    %166 = memref.load %arg1[%c2_107] : memref<3xf32, #tpu.memory_space<smem>>
    %167 = vector.broadcast %166 : f32 to vector<48x256xf32>
    %168 = arith.mulf %167, %163 : vector<48x256xf32>
    %169 = arith.select %165, %163, %168 : vector<48x256xi1>, vector<48x256xf32>
    %c0_108 = arith.constant 0 : index
    %c0_109 = arith.constant 0 : index
    %c0_110 = arith.constant 0 : index
    %170 = vector.load %arg7[%c0_108, %c0_109, %c0_110] : memref<2x48x256xf32, #tpu.memory_space<vmem>>, vector<1x48x256xf32>
    %171 = vector.shape_cast %170 : vector<1x48x256xf32> to vector<48x256xf32>
    %172 = vector.shape_cast %169 : vector<48x256xf32> to vector<1x48x256xf32>
    tpu.vector_store %arg7[%c0_108, %c0_109, %c0_110], %172 {strides = array<i32>} : memref<2x48x256xf32, #tpu.memory_space<vmem>>, vector<1x48x256xf32>,
    %c1_111 = arith.constant 1 : index
    %c0_112 = arith.constant 0 : index
    %c0_113 = arith.constant 0 : index
    %173 = vector.load %arg2[%c1_111, %c0_112, %c0_113] : memref<2x4x256xf32, #tpu.memory_space<vmem>>, vector<1x4x256xf32>
    %174 = vector.shape_cast %173 : vector<1x4x256xf32> to vector<4x256xf32>
    %c4_114 = arith.constant 4 : index
    %c0_115 = arith.constant 0 : index
    %c0_116 = arith.constant 0 : index
    %175 = vector.load %arg3[%c4_114, %c0_115, %c0_116] : memref<9x4x256xf32, #tpu.memory_space<vmem>>, vector<1x4x256xf32>
    %176 = vector.shape_cast %175 : vector<1x4x256xf32> to vector<4x256xf32>
    %177 = arith.mulf %174, %176 : vector<4x256xf32>
    %c17_i32_117 = arith.constant 17 : i32
    %178 = tpu.dynamic_rotate %174 by %c17_i32_117 dim 1 : vector<4x256xf32>, i32 -> vector<4x256xf32>
    %c0_118 = arith.constant 0 : index
    %c0_119 = arith.constant 0 : index
    %c0_120 = arith.constant 0 : index
    %179 = vector.load %arg3[%c0_118, %c0_119, %c0_120] : memref<9x4x256xf32, #tpu.memory_space<vmem>>, vector<1x4x256xf32>
    %180 = vector.shape_cast %179 : vector<1x4x256xf32> to vector<4x256xf32>
    %181 = arith.mulf %178, %180 : vector<4x256xf32>
    %182 = arith.addf %177, %181 : vector<4x256xf32>
    %c16_i32_121 = arith.constant 16 : i32
    %183 = tpu.dynamic_rotate %174 by %c16_i32_121 dim 1 : vector<4x256xf32>, i32 -> vector<4x256xf32>
    %c1_122 = arith.constant 1 : index
    %c0_123 = arith.constant 0 : index
    %c0_124 = arith.constant 0 : index
    %184 = vector.load %arg3[%c1_122, %c0_123, %c0_124] : memref<9x4x256xf32, #tpu.memory_space<vmem>>, vector<1x4x256xf32>
    %185 = vector.shape_cast %184 : vector<1x4x256xf32> to vector<4x256xf32>
    %186 = arith.mulf %183, %185 : vector<4x256xf32>
    %187 = arith.addf %182, %186 : vector<4x256xf32>
    %c15_i32_125 = arith.constant 15 : i32
    %188 = tpu.dynamic_rotate %174 by %c15_i32_125 dim 1 : vector<4x256xf32>, i32 -> vector<4x256xf32>
    %c2_126 = arith.constant 2 : index
    %c0_127 = arith.constant 0 : index
    %c0_128 = arith.constant 0 : index
    %189 = vector.load %arg3[%c2_126, %c0_127, %c0_128] : memref<9x4x256xf32, #tpu.memory_space<vmem>>, vector<1x4x256xf32>
    %190 = vector.shape_cast %189 : vector<1x4x256xf32> to vector<4x256xf32>
    %191 = arith.mulf %188, %190 : vector<4x256xf32>
    %192 = arith.addf %187, %191 : vector<4x256xf32>
    %c1_i32_129 = arith.constant 1 : i32
    %193 = tpu.dynamic_rotate %174 by %c1_i32_129 dim 1 : vector<4x256xf32>, i32 -> vector<4x256xf32>
    %c3_130 = arith.constant 3 : index
    %c0_131 = arith.constant 0 : index
    %c0_132 = arith.constant 0 : index
    %194 = vector.load %arg3[%c3_130, %c0_131, %c0_132] : memref<9x4x256xf32, #tpu.memory_space<vmem>>, vector<1x4x256xf32>
    %195 = vector.shape_cast %194 : vector<1x4x256xf32> to vector<4x256xf32>
    %196 = arith.mulf %193, %195 : vector<4x256xf32>
    %197 = arith.addf %192, %196 : vector<4x256xf32>
    %c255_i32_133 = arith.constant 255 : i32
    %198 = tpu.dynamic_rotate %174 by %c255_i32_133 dim 1 : vector<4x256xf32>, i32 -> vector<4x256xf32>
    %c5_134 = arith.constant 5 : index
    %c0_135 = arith.constant 0 : index
    %c0_136 = arith.constant 0 : index
    %199 = vector.load %arg3[%c5_134, %c0_135, %c0_136] : memref<9x4x256xf32, #tpu.memory_space<vmem>>, vector<1x4x256xf32>
    %200 = vector.shape_cast %199 : vector<1x4x256xf32> to vector<4x256xf32>
    %201 = arith.mulf %198, %200 : vector<4x256xf32>
    %202 = arith.addf %197, %201 : vector<4x256xf32>
    %c241_i32_137 = arith.constant 241 : i32
    %203 = tpu.dynamic_rotate %174 by %c241_i32_137 dim 1 : vector<4x256xf32>, i32 -> vector<4x256xf32>
    %c6_138 = arith.constant 6 : index
    %c0_139 = arith.constant 0 : index
    %c0_140 = arith.constant 0 : index
    %204 = vector.load %arg3[%c6_138, %c0_139, %c0_140] : memref<9x4x256xf32, #tpu.memory_space<vmem>>, vector<1x4x256xf32>
    %205 = vector.shape_cast %204 : vector<1x4x256xf32> to vector<4x256xf32>
    %206 = arith.mulf %203, %205 : vector<4x256xf32>
    %207 = arith.addf %202, %206 : vector<4x256xf32>
    %c240_i32_141 = arith.constant 240 : i32
    %208 = tpu.dynamic_rotate %174 by %c240_i32_141 dim 1 : vector<4x256xf32>, i32 -> vector<4x256xf32>
    %c7_142 = arith.constant 7 : index
    %c0_143 = arith.constant 0 : index
    %c0_144 = arith.constant 0 : index
    %209 = vector.load %arg3[%c7_142, %c0_143, %c0_144] : memref<9x4x256xf32, #tpu.memory_space<vmem>>, vector<1x4x256xf32>
    %210 = vector.shape_cast %209 : vector<1x4x256xf32> to vector<4x256xf32>
    %211 = arith.mulf %208, %210 : vector<4x256xf32>
    %212 = arith.addf %207, %211 : vector<4x256xf32>
    %c239_i32_145 = arith.constant 239 : i32
    %213 = tpu.dynamic_rotate %174 by %c239_i32_145 dim 1 : vector<4x256xf32>, i32 -> vector<4x256xf32>
    %c8_146 = arith.constant 8 : index
    %c0_147 = arith.constant 0 : index
    %c0_148 = arith.constant 0 : index
    %214 = vector.load %arg3[%c8_146, %c0_147, %c0_148] : memref<9x4x256xf32, #tpu.memory_space<vmem>>, vector<1x4x256xf32>
    %215 = vector.shape_cast %214 : vector<1x4x256xf32> to vector<4x256xf32>
    %216 = arith.mulf %213, %215 : vector<4x256xf32>
    %217 = arith.addf %212, %216 : vector<4x256xf32>
    %c0_149 = arith.constant 0 : index
    %c0_150 = arith.constant 0 : index
    %c0_151 = arith.constant 0 : index
    %218 = vector.load %arg6[%c0_149, %c0_150, %c0_151] : memref<3x48x13xf32, #tpu.memory_space<vmem>>, vector<1x48x13xf32>
    %219 = vector.shape_cast %218 : vector<1x48x13xf32> to vector<48x13xf32>
    %220 = vector.extract_strided_slice %219 {offsets = [0, 0], sizes = [12, 4], strides = [1, 1]} : vector<48x13xf32> to vector<12x4xf32>
    %cst_152 = arith.constant dense<0.000000e+00> : vector<12x256xf32>
    %221 = tpu.matmul %220, %217, %cst_152 {dimension_numbers = #tpu.dot_dimension_numbers<[1], [0], [0], [1], [0, 0, 1, 1], [], []>} : vector<12x4xf32>, vector<4x256xf32>, vector<12x256xf32> -> vector<12x256xf32>
    %222 = vector.extract_strided_slice %219 {offsets = [0, 12], sizes = [12, 1], strides = [1, 1]} : vector<48x13xf32> to vector<12x1xf32>
    %223 = vector.broadcast %222 : vector<12x1xf32> to vector<12x256xf32>
    %224 = arith.addf %221, %223 : vector<12x256xf32>
    %cst_153 = arith.constant 0.000000e+00 : f32
    %225 = vector.broadcast %cst_153 : f32 to vector<12x256xf32>
    %226 = arith.cmpf oge, %224, %225 : vector<12x256xf32>
    %c0_154 = arith.constant 0 : index
    %227 = memref.load %arg1[%c0_154] : memref<3xf32, #tpu.memory_space<smem>>
    %228 = vector.broadcast %227 : f32 to vector<12x256xf32>
    %229 = arith.mulf %228, %224 : vector<12x256xf32>
    %230 = arith.select %226, %224, %229 : vector<12x256xi1>, vector<12x256xf32>
    %c4_155 = arith.constant 4 : index
    %c0_156 = arith.constant 0 : index
    %c0_157 = arith.constant 0 : index
    %231 = vector.load %arg4[%c4_155, %c0_156, %c0_157] : memref<9x12x256xf32, #tpu.memory_space<vmem>>, vector<1x12x256xf32>
    %232 = vector.shape_cast %231 : vector<1x12x256xf32> to vector<12x256xf32>
    %233 = arith.mulf %230, %232 : vector<12x256xf32>
    %c17_i32_158 = arith.constant 17 : i32
    %234 = tpu.dynamic_rotate %230 by %c17_i32_158 dim 1 : vector<12x256xf32>, i32 -> vector<12x256xf32>
    %c0_159 = arith.constant 0 : index
    %c0_160 = arith.constant 0 : index
    %c0_161 = arith.constant 0 : index
    %235 = vector.load %arg4[%c0_159, %c0_160, %c0_161] : memref<9x12x256xf32, #tpu.memory_space<vmem>>, vector<1x12x256xf32>
    %236 = vector.shape_cast %235 : vector<1x12x256xf32> to vector<12x256xf32>
    %237 = arith.mulf %234, %236 : vector<12x256xf32>
    %238 = arith.addf %233, %237 : vector<12x256xf32>
    %c16_i32_162 = arith.constant 16 : i32
    %239 = tpu.dynamic_rotate %230 by %c16_i32_162 dim 1 : vector<12x256xf32>, i32 -> vector<12x256xf32>
    %c1_163 = arith.constant 1 : index
    %c0_164 = arith.constant 0 : index
    %c0_165 = arith.constant 0 : index
    %240 = vector.load %arg4[%c1_163, %c0_164, %c0_165] : memref<9x12x256xf32, #tpu.memory_space<vmem>>, vector<1x12x256xf32>
    %241 = vector.shape_cast %240 : vector<1x12x256xf32> to vector<12x256xf32>
    %242 = arith.mulf %239, %241 : vector<12x256xf32>
    %243 = arith.addf %238, %242 : vector<12x256xf32>
    %c15_i32_166 = arith.constant 15 : i32
    %244 = tpu.dynamic_rotate %230 by %c15_i32_166 dim 1 : vector<12x256xf32>, i32 -> vector<12x256xf32>
    %c2_167 = arith.constant 2 : index
    %c0_168 = arith.constant 0 : index
    %c0_169 = arith.constant 0 : index
    %245 = vector.load %arg4[%c2_167, %c0_168, %c0_169] : memref<9x12x256xf32, #tpu.memory_space<vmem>>, vector<1x12x256xf32>
    %246 = vector.shape_cast %245 : vector<1x12x256xf32> to vector<12x256xf32>
    %247 = arith.mulf %244, %246 : vector<12x256xf32>
    %248 = arith.addf %243, %247 : vector<12x256xf32>
    %c1_i32_170 = arith.constant 1 : i32
    %249 = tpu.dynamic_rotate %230 by %c1_i32_170 dim 1 : vector<12x256xf32>, i32 -> vector<12x256xf32>
    %c3_171 = arith.constant 3 : index
    %c0_172 = arith.constant 0 : index
    %c0_173 = arith.constant 0 : index
    %250 = vector.load %arg4[%c3_171, %c0_172, %c0_173] : memref<9x12x256xf32, #tpu.memory_space<vmem>>, vector<1x12x256xf32>
    %251 = vector.shape_cast %250 : vector<1x12x256xf32> to vector<12x256xf32>
    %252 = arith.mulf %249, %251 : vector<12x256xf32>
    %253 = arith.addf %248, %252 : vector<12x256xf32>
    %c255_i32_174 = arith.constant 255 : i32
    %254 = tpu.dynamic_rotate %230 by %c255_i32_174 dim 1 : vector<12x256xf32>, i32 -> vector<12x256xf32>
    %c5_175 = arith.constant 5 : index
    %c0_176 = arith.constant 0 : index
    %c0_177 = arith.constant 0 : index
    %255 = vector.load %arg4[%c5_175, %c0_176, %c0_177] : memref<9x12x256xf32, #tpu.memory_space<vmem>>, vector<1x12x256xf32>
    %256 = vector.shape_cast %255 : vector<1x12x256xf32> to vector<12x256xf32>
    %257 = arith.mulf %254, %256 : vector<12x256xf32>
    %258 = arith.addf %253, %257 : vector<12x256xf32>
    %c241_i32_178 = arith.constant 241 : i32
    %259 = tpu.dynamic_rotate %230 by %c241_i32_178 dim 1 : vector<12x256xf32>, i32 -> vector<12x256xf32>
    %c6_179 = arith.constant 6 : index
    %c0_180 = arith.constant 0 : index
    %c0_181 = arith.constant 0 : index
    %260 = vector.load %arg4[%c6_179, %c0_180, %c0_181] : memref<9x12x256xf32, #tpu.memory_space<vmem>>, vector<1x12x256xf32>
    %261 = vector.shape_cast %260 : vector<1x12x256xf32> to vector<12x256xf32>
    %262 = arith.mulf %259, %261 : vector<12x256xf32>
    %263 = arith.addf %258, %262 : vector<12x256xf32>
    %c240_i32_182 = arith.constant 240 : i32
    %264 = tpu.dynamic_rotate %230 by %c240_i32_182 dim 1 : vector<12x256xf32>, i32 -> vector<12x256xf32>
    %c7_183 = arith.constant 7 : index
    %c0_184 = arith.constant 0 : index
    %c0_185 = arith.constant 0 : index
    %265 = vector.load %arg4[%c7_183, %c0_184, %c0_185] : memref<9x12x256xf32, #tpu.memory_space<vmem>>, vector<1x12x256xf32>
    %266 = vector.shape_cast %265 : vector<1x12x256xf32> to vector<12x256xf32>
    %267 = arith.mulf %264, %266 : vector<12x256xf32>
    %268 = arith.addf %263, %267 : vector<12x256xf32>
    %c239_i32_186 = arith.constant 239 : i32
    %269 = tpu.dynamic_rotate %230 by %c239_i32_186 dim 1 : vector<12x256xf32>, i32 -> vector<12x256xf32>
    %c8_187 = arith.constant 8 : index
    %c0_188 = arith.constant 0 : index
    %c0_189 = arith.constant 0 : index
    %270 = vector.load %arg4[%c8_187, %c0_188, %c0_189] : memref<9x12x256xf32, #tpu.memory_space<vmem>>, vector<1x12x256xf32>
    %271 = vector.shape_cast %270 : vector<1x12x256xf32> to vector<12x256xf32>
    %272 = arith.mulf %269, %271 : vector<12x256xf32>
    %273 = arith.addf %268, %272 : vector<12x256xf32>
    %c1_190 = arith.constant 1 : index
    %c0_191 = arith.constant 0 : index
    %c0_192 = arith.constant 0 : index
    %274 = vector.load %arg6[%c1_190, %c0_191, %c0_192] : memref<3x48x13xf32, #tpu.memory_space<vmem>>, vector<1x48x13xf32>
    %275 = vector.shape_cast %274 : vector<1x48x13xf32> to vector<48x13xf32>
    %276 = vector.extract_strided_slice %275 {offsets = [0, 0], sizes = [12, 12], strides = [1, 1]} : vector<48x13xf32> to vector<12x12xf32>
    %cst_193 = arith.constant dense<0.000000e+00> : vector<12x256xf32>
    %277 = tpu.matmul %276, %273, %cst_193 {dimension_numbers = #tpu.dot_dimension_numbers<[1], [0], [0], [1], [0, 0, 1, 1], [], []>} : vector<12x12xf32>, vector<12x256xf32>, vector<12x256xf32> -> vector<12x256xf32>
    %278 = vector.extract_strided_slice %275 {offsets = [0, 12], sizes = [12, 1], strides = [1, 1]} : vector<48x13xf32> to vector<12x1xf32>
    %279 = vector.broadcast %278 : vector<12x1xf32> to vector<12x256xf32>
    %280 = arith.addf %277, %279 : vector<12x256xf32>
    %cst_194 = arith.constant 0.000000e+00 : f32
    %281 = vector.broadcast %cst_194 : f32 to vector<12x256xf32>
    %282 = arith.cmpf oge, %280, %281 : vector<12x256xf32>
    %c1_195 = arith.constant 1 : index
    %283 = memref.load %arg1[%c1_195] : memref<3xf32, #tpu.memory_space<smem>>
    %284 = vector.broadcast %283 : f32 to vector<12x256xf32>
    %285 = arith.mulf %284, %280 : vector<12x256xf32>
    %286 = arith.select %282, %280, %285 : vector<12x256xi1>, vector<12x256xf32>
    %c4_196 = arith.constant 4 : index
    %c0_197 = arith.constant 0 : index
    %c0_198 = arith.constant 0 : index
    %287 = vector.load %arg5[%c4_196, %c0_197, %c0_198] : memref<9x12x256xf32, #tpu.memory_space<vmem>>, vector<1x12x256xf32>
    %288 = vector.shape_cast %287 : vector<1x12x256xf32> to vector<12x256xf32>
    %289 = arith.mulf %286, %288 : vector<12x256xf32>
    %c17_i32_199 = arith.constant 17 : i32
    %290 = tpu.dynamic_rotate %286 by %c17_i32_199 dim 1 : vector<12x256xf32>, i32 -> vector<12x256xf32>
    %c0_200 = arith.constant 0 : index
    %c0_201 = arith.constant 0 : index
    %c0_202 = arith.constant 0 : index
    %291 = vector.load %arg5[%c0_200, %c0_201, %c0_202] : memref<9x12x256xf32, #tpu.memory_space<vmem>>, vector<1x12x256xf32>
    %292 = vector.shape_cast %291 : vector<1x12x256xf32> to vector<12x256xf32>
    %293 = arith.mulf %290, %292 : vector<12x256xf32>
    %294 = arith.addf %289, %293 : vector<12x256xf32>
    %c16_i32_203 = arith.constant 16 : i32
    %295 = tpu.dynamic_rotate %286 by %c16_i32_203 dim 1 : vector<12x256xf32>, i32 -> vector<12x256xf32>
    %c1_204 = arith.constant 1 : index
    %c0_205 = arith.constant 0 : index
    %c0_206 = arith.constant 0 : index
    %296 = vector.load %arg5[%c1_204, %c0_205, %c0_206] : memref<9x12x256xf32, #tpu.memory_space<vmem>>, vector<1x12x256xf32>
    %297 = vector.shape_cast %296 : vector<1x12x256xf32> to vector<12x256xf32>
    %298 = arith.mulf %295, %297 : vector<12x256xf32>
    %299 = arith.addf %294, %298 : vector<12x256xf32>
    %c15_i32_207 = arith.constant 15 : i32
    %300 = tpu.dynamic_rotate %286 by %c15_i32_207 dim 1 : vector<12x256xf32>, i32 -> vector<12x256xf32>
    %c2_208 = arith.constant 2 : index
    %c0_209 = arith.constant 0 : index
    %c0_210 = arith.constant 0 : index
    %301 = vector.load %arg5[%c2_208, %c0_209, %c0_210] : memref<9x12x256xf32, #tpu.memory_space<vmem>>, vector<1x12x256xf32>
    %302 = vector.shape_cast %301 : vector<1x12x256xf32> to vector<12x256xf32>
    %303 = arith.mulf %300, %302 : vector<12x256xf32>
    %304 = arith.addf %299, %303 : vector<12x256xf32>
    %c1_i32_211 = arith.constant 1 : i32
    %305 = tpu.dynamic_rotate %286 by %c1_i32_211 dim 1 : vector<12x256xf32>, i32 -> vector<12x256xf32>
    %c3_212 = arith.constant 3 : index
    %c0_213 = arith.constant 0 : index
    %c0_214 = arith.constant 0 : index
    %306 = vector.load %arg5[%c3_212, %c0_213, %c0_214] : memref<9x12x256xf32, #tpu.memory_space<vmem>>, vector<1x12x256xf32>
    %307 = vector.shape_cast %306 : vector<1x12x256xf32> to vector<12x256xf32>
    %308 = arith.mulf %305, %307 : vector<12x256xf32>
    %309 = arith.addf %304, %308 : vector<12x256xf32>
    %c255_i32_215 = arith.constant 255 : i32
    %310 = tpu.dynamic_rotate %286 by %c255_i32_215 dim 1 : vector<12x256xf32>, i32 -> vector<12x256xf32>
    %c5_216 = arith.constant 5 : index
    %c0_217 = arith.constant 0 : index
    %c0_218 = arith.constant 0 : index
    %311 = vector.load %arg5[%c5_216, %c0_217, %c0_218] : memref<9x12x256xf32, #tpu.memory_space<vmem>>, vector<1x12x256xf32>
    %312 = vector.shape_cast %311 : vector<1x12x256xf32> to vector<12x256xf32>
    %313 = arith.mulf %310, %312 : vector<12x256xf32>
    %314 = arith.addf %309, %313 : vector<12x256xf32>
    %c241_i32_219 = arith.constant 241 : i32
    %315 = tpu.dynamic_rotate %286 by %c241_i32_219 dim 1 : vector<12x256xf32>, i32 -> vector<12x256xf32>
    %c6_220 = arith.constant 6 : index
    %c0_221 = arith.constant 0 : index
    %c0_222 = arith.constant 0 : index
    %316 = vector.load %arg5[%c6_220, %c0_221, %c0_222] : memref<9x12x256xf32, #tpu.memory_space<vmem>>, vector<1x12x256xf32>
    %317 = vector.shape_cast %316 : vector<1x12x256xf32> to vector<12x256xf32>
    %318 = arith.mulf %315, %317 : vector<12x256xf32>
    %319 = arith.addf %314, %318 : vector<12x256xf32>
    %c240_i32_223 = arith.constant 240 : i32
    %320 = tpu.dynamic_rotate %286 by %c240_i32_223 dim 1 : vector<12x256xf32>, i32 -> vector<12x256xf32>
    %c7_224 = arith.constant 7 : index
    %c0_225 = arith.constant 0 : index
    %c0_226 = arith.constant 0 : index
    %321 = vector.load %arg5[%c7_224, %c0_225, %c0_226] : memref<9x12x256xf32, #tpu.memory_space<vmem>>, vector<1x12x256xf32>
    %322 = vector.shape_cast %321 : vector<1x12x256xf32> to vector<12x256xf32>
    %323 = arith.mulf %320, %322 : vector<12x256xf32>
    %324 = arith.addf %319, %323 : vector<12x256xf32>
    %c239_i32_227 = arith.constant 239 : i32
    %325 = tpu.dynamic_rotate %286 by %c239_i32_227 dim 1 : vector<12x256xf32>, i32 -> vector<12x256xf32>
    %c8_228 = arith.constant 8 : index
    %c0_229 = arith.constant 0 : index
    %c0_230 = arith.constant 0 : index
    %326 = vector.load %arg5[%c8_228, %c0_229, %c0_230] : memref<9x12x256xf32, #tpu.memory_space<vmem>>, vector<1x12x256xf32>
    %327 = vector.shape_cast %326 : vector<1x12x256xf32> to vector<12x256xf32>
    %328 = arith.mulf %325, %327 : vector<12x256xf32>
    %329 = arith.addf %324, %328 : vector<12x256xf32>
    %c2_231 = arith.constant 2 : index
    %c0_232 = arith.constant 0 : index
    %c0_233 = arith.constant 0 : index
    %330 = vector.load %arg6[%c2_231, %c0_232, %c0_233] : memref<3x48x13xf32, #tpu.memory_space<vmem>>, vector<1x48x13xf32>
    %331 = vector.shape_cast %330 : vector<1x48x13xf32> to vector<48x13xf32>
    %332 = vector.extract_strided_slice %331 {offsets = [0, 0], sizes = [48, 12], strides = [1, 1]} : vector<48x13xf32> to vector<48x12xf32>
    %cst_234 = arith.constant dense<0.000000e+00> : vector<48x256xf32>
    %333 = tpu.matmul %332, %329, %cst_234 {dimension_numbers = #tpu.dot_dimension_numbers<[1], [0], [0], [1], [0, 0, 1, 1], [], []>} : vector<48x12xf32>, vector<12x256xf32>, vector<48x256xf32> -> vector<48x256xf32>
    %334 = vector.extract_strided_slice %331 {offsets = [0, 12], sizes = [48, 1], strides = [1, 1]} : vector<48x13xf32> to vector<48x1xf32>
    %335 = vector.broadcast %334 : vector<48x1xf32> to vector<48x256xf32>
    %336 = arith.addf %333, %335 : vector<48x256xf32>
    %cst_235 = arith.constant 0.000000e+00 : f32
    %337 = vector.broadcast %cst_235 : f32 to vector<48x256xf32>
    %338 = arith.cmpf oge, %336, %337 : vector<48x256xf32>
    %c2_236 = arith.constant 2 : index
    %339 = memref.load %arg1[%c2_236] : memref<3xf32, #tpu.memory_space<smem>>
    %340 = vector.broadcast %339 : f32 to vector<48x256xf32>
    %341 = arith.mulf %340, %336 : vector<48x256xf32>
    %342 = arith.select %338, %336, %341 : vector<48x256xi1>, vector<48x256xf32>
    %c1_237 = arith.constant 1 : index
    %c0_238 = arith.constant 0 : index
    %c0_239 = arith.constant 0 : index
    %343 = vector.load %arg7[%c1_237, %c0_238, %c0_239] : memref<2x48x256xf32, #tpu.memory_space<vmem>>, vector<1x48x256xf32>
    %344 = vector.shape_cast %343 : vector<1x48x256xf32> to vector<48x256xf32>
    %345 = vector.shape_cast %342 : vector<48x256xf32> to vector<1x48x256xf32>
    tpu.vector_store %arg7[%c1_237, %c0_238, %c0_239], %345 {strides = array<i32>} : memref<2x48x256xf32, #tpu.memory_space<vmem>>, vector<1x48x256xf32>,
    return
  }
  func.func @transform_0(%arg0: i32) -> i32 {
    %c0_i32 = arith.constant 0 : i32
    %c0_i32_0 = arith.constant 0 : i32
    return %c0_i32 : i32
  }
  func.func @transform_1(%arg0: i32) -> (i32, i32, i32) {
    %c0_i32 = arith.constant 0 : i32
    %c0_i32_0 = arith.constant 0 : i32
    %c0_i32_1 = arith.constant 0 : i32
    return %arg0, %c0_i32, %c0_i32_0 : i32, i32, i32
  }
  func.func @transform_2(%arg0: i32) -> (i32, i32, i32) {
    %c0_i32 = arith.constant 0 : i32
    %c0_i32_0 = arith.constant 0 : i32
    %c0_i32_1 = arith.constant 0 : i32
    %c0_i32_2 = arith.constant 0 : i32
    return %c0_i32, %c0_i32_0, %c0_i32_1 : i32, i32, i32
  }
  func.func @transform_3(%arg0: i32) -> (i32, i32, i32) {
    %c0_i32 = arith.constant 0 : i32
    %c0_i32_0 = arith.constant 0 : i32
    %c0_i32_1 = arith.constant 0 : i32
    %c0_i32_2 = arith.constant 0 : i32
    return %c0_i32, %c0_i32_0, %c0_i32_1 : i32, i32, i32
  }
  func.func @transform_4(%arg0: i32) -> (i32, i32, i32) {
    %c0_i32 = arith.constant 0 : i32
    %c0_i32_0 = arith.constant 0 : i32
    %c0_i32_1 = arith.constant 0 : i32
    %c0_i32_2 = arith.constant 0 : i32
    return %c0_i32, %c0_i32_0, %c0_i32_1 : i32, i32, i32
  }
  func.func @transform_5(%arg0: i32) -> (i32, i32, i32) {
    %c0_i32 = arith.constant 0 : i32
    %c0_i32_0 = arith.constant 0 : i32
    %c0_i32_1 = arith.constant 0 : i32
    %c0_i32_2 = arith.constant 0 : i32
    return %c0_i32, %c0_i32_0, %c0_i32_1 : i32, i32, i32
  }
  func.func @transform_6(%arg0: i32) -> (i32, i32, i32) {
    %c0_i32 = arith.constant 0 : i32
    %c0_i32_0 = arith.constant 0 : i32
    %c0_i32_1 = arith.constant 0 : i32
    return %arg0, %c0_i32, %c0_i32_0 : i32, i32, i32
  }
}

</mosaic_0001>

<llo_original>
// kernel: block2_pallas.1
$region0: #{block2_pallas.1}
  #allocation0 [shape = 'u32[]', space=smem, size = 0x4, offset = 0x4, fixed_abs, tag = 'smem constant byte address 0x4 - core index']
  #allocation1 [shape = 'u32[72,128]{1,0:T(1,128)}', space=vmem, size = 0x9000, scoped, tag = 'internal scratch']
  %s0 = inlined_call_operand.hbm [shape: f32[3], index: 0, kind: input, shape index: {}]
  %s1 = inlined_call_operand.vmem [shape: f32[2,4,256], index: 1, kind: input, shape index: {}]
  %s2 = inlined_call_operand.hbm [shape: f32[9,4,256], index: 2, kind: input, shape index: {}]
  %s3 = inlined_call_operand.vmem [shape: f32[9,12,256], index: 3, kind: input, shape index: {}]
  %s4 = inlined_call_operand.hbm [shape: f32[9,12,256], index: 4, kind: input, shape index: {}]
  %s5 = inlined_call_operand.vmem [shape: f32[3,48,13], index: 5, kind: input, shape index: {}]
  %s6 = inlined_call_operand.vmem [shape: f32[2,48,256], index: 6, kind: output, shape index: {}]
  %s7 = sld [smem:[#allocation0]]
  $region46: #{block2_pallas.1} parent=0
    _
  %s9 = ssub.s32 1, %s7
  %s10 = scalar_select 0, %s9, %s7
  $region1: #{block2_pallas.1} parent=0
    #allocation2 [shape = 'u8[512]{0}', space=smem, size = 0x200, scoped, tag = 'input window, operand 0, single buffered']
    #allocation3 [shape = 's32[1]{0}', space=sflag, size = 0x4, scoped, tag = 'scoped memory for block2_pallas.1']
    #allocation4 [shape = 's32[1]{0}', space=sflag, size = 0x4, scoped, tag = 'scoped memory for block2_pallas.1']
    #allocation5 [shape = 'u8[36864]{0}', space=vmem, size = 0x9000, scoped, tag = 'input window, operand 2, single buffered']
    #allocation6 [shape = 'u8[147456]{0}', space=vmem, size = 0x24000, scoped, tag = 'input window, operand 4, single buffered']
    #allocation7 [shape = 's32[1]{0}', space=sflag, size = 0x4, scoped, tag = 'scoped memory for block2_pallas.1']
    %11 = vsyncpa [#allocation4], 0
    %12 = vsyncpa [#allocation3], 0
    %13 = vsyncpa [#allocation7], 0
    // Predicated region
    $region2: #{block2_pallas.1} parent=1 // pred_check
      _
    $region3: #{block2_pallas.1} parent=1 // pred_check_branch
      %15 = sbr.rel (0) target = $region5
    $region4: #{block2_pallas.1} parent=1 // pred_region
      %17 = vsyncadd [#allocation4], 0
      %s19 = sshll.u32 %s0, 4
      %s20 = int_to_ptr.hbm [resolvable:$true] %s19
      %22 = dma.hbm_to_smem %s20, 16, [#allocation2], [#allocation4]
    $region5: #{block2_pallas.1} parent=1 // pred_fallthru
      _
    // Predicated region
    $region6: #{block2_pallas.1} parent=1 // pred_check
      _
    $region7: #{block2_pallas.1} parent=1 // pred_check_branch
      %24 = sbr.rel (0) target = $region9
    $region8: #{block2_pallas.1} parent=1 // pred_region
      _
    $region9: #{block2_pallas.1} parent=1 // pred_fallthru
      _
    // Predicated region
    $region10: #{block2_pallas.1} parent=1 // pred_check
      _
    $region11: #{block2_pallas.1} parent=1 // pred_check_branch
      %26 = sbr.rel (0) target = $region13
    $region12: #{block2_pallas.1} parent=1 // pred_region
      %28 = vsyncadd [#allocation3], 0
      %s29 = sshll.u32 %s2, 4
      %s30 = int_to_ptr.hbm [resolvable:$true] %s29
      %s31 = sshll.u32 [#allocation5], 4
      %s32 = int_to_ptr.vmem [resolvable:$true] %s31
      %37 = dma.hbm_to_vmem [thread:$0]  %s30, 1152, %s32, [#allocation3], 128, 128, 8
    $region13: #{block2_pallas.1} parent=1 // pred_fallthru
      _
    // Predicated region
    $region14: #{block2_pallas.1} parent=1 // pred_check
      _
    $region15: #{block2_pallas.1} parent=1 // pred_check_branch
      %39 = sbr.rel (0) target = $region17
    $region16: #{block2_pallas.1} parent=1 // pred_region
      _
    $region17: #{block2_pallas.1} parent=1 // pred_fallthru
      _
    // Predicated region
    $region18: #{block2_pallas.1} parent=1 // pred_check
      _
    $region19: #{block2_pallas.1} parent=1 // pred_check_branch
      %41 = sbr.rel (0) target = $region21
    $region20: #{block2_pallas.1} parent=1 // pred_region
      %43 = vsyncadd [#allocation7], 0
      %s44 = sshll.u32 %s4, 4
      %s45 = int_to_ptr.hbm [resolvable:$true] %s44
      %s46 = sshll.u32 [#allocation6], 4
      %s47 = int_to_ptr.vmem [resolvable:$true] %s46
      %52 = dma.hbm_to_vmem [thread:$0]  %s45, 4608, %s47, [#allocation7], 256, 256, 16
    $region21: #{block2_pallas.1} parent=1 // pred_fallthru
      _
    // Predicated region
    $region22: #{block2_pallas.1} parent=1 // pred_check
      _
    $region23: #{block2_pallas.1} parent=1 // pred_check_branch
      %54 = sbr.rel (0) target = $region25
    $region24: #{block2_pallas.1} parent=1 // pred_region
      _
    $region25: #{block2_pallas.1} parent=1 // pred_fallthru
      _
    // Predicated region
    $region26: #{block2_pallas.1} parent=1 // pred_check
      _
    $region27: #{block2_pallas.1} parent=1 // pred_check_branch
      %56 = sbr.rel (0) target = $region29
    $region28: #{block2_pallas.1} parent=1 // pred_region
      %58 = dma.done [#allocation4], 16
    $region29: #{block2_pallas.1} parent=1 // pred_fallthru
      _
    // Predicated region
    $region30: #{block2_pallas.1} parent=1 // pred_check
      _
    $region31: #{block2_pallas.1} parent=1 // pred_check_branch
      %60 = sbr.rel (0) target = $region33
    $region32: #{block2_pallas.1} parent=1 // pred_region
      %62 = dma.done [#allocation3], 1152
    $region33: #{block2_pallas.1} parent=1 // pred_fallthru
      _
    // Predicated region
    $region34: #{block2_pallas.1} parent=1 // pred_check
      _
    $region35: #{block2_pallas.1} parent=1 // pred_check_branch
      %64 = sbr.rel (0) target = $region37
    $region36: #{block2_pallas.1} parent=1 // pred_region
      %66 = dma.done [#allocation7], 4608
    $region37: #{block2_pallas.1} parent=1 // pred_fallthru
      _
    %67 = sfence
    %v68 = vld [vmem:[%s1] sm:$0xff]
    %s69 = scalar_lea.vmem [#allocation5], 32
    %v70 = vld [vmem:[%s69] sm:$0xff]
    %v71 = vmul.f32 %v68, %v70
    %73 = vst [vmem:[#allocation1] ss:$2 sm:$0xff] %v68
    %v74 = vld.sshfl [vmem:[#allocation1] sm:$0xff pattern:$0x75316420]
    %v75 = vld.sshfl [vmem:[#allocation1 + $0x8] sm:$0xff pattern:$0x75316420]
    %78 = vrot.lane.b32.xlu0 %v74, 17
    %v79 = vpop.permute.xlu0 %78
    %80 = vrot.lane.b32.xlu0 %v75, 17
    %v81 = vpop.permute.xlu0 %80
    %v82 = vlaneseq
    %v83 = vand.u32 %v82, 127
    %vm84 = vcmp.lt.s32.totalorder %v83, 17
    %v85 = vsel %vm84, %v79, %v81
    %v86 = vsel %vm84, %v81, %v79
    %v87 = vld [vmem:[#allocation5] sm:$0xff]
    %89 = vst [vmem:[#allocation1] ss:$2 sm:$0xff] %v87
    %v90 = vld.sshfl [vmem:[#allocation1] sm:$0xff pattern:$0x75316420]
    %v91 = vld.sshfl [vmem:[#allocation1 + $0x8] sm:$0xff pattern:$0x75316420]
    %v94 = vmul.f32 %v86, %v90
    %v95 = vmul.f32 %v85, %v91
    %v98 = vrot.slane %v95, 4
    %vm99 = vcmask 1043456
    %v100 = vsel %vm99, %v94, %v98
    %v102 = vadd.f32 %v71, %v100
    %103 = vst [vmem:[#allocation1] ss:$2 sm:$0xff] %v68
    %v104 = vld.sshfl [vmem:[#allocation1] sm:$0xff pattern:$0x75316420]
    %v105 = vld.sshfl [vmem:[#allocation1 + $0x8] sm:$0xff pattern:$0x75316420]
    %108 = vrot.lane.b32.xlu0 %v104, 16
    %v109 = vpop.permute.xlu0 %108
    %110 = vrot.lane.b32.xlu0 %v105, 16
    %v111 = vpop.permute.xlu0 %110
    %vm112 = vcmp.lt.s32.totalorder %v83, 16
    %v113 = vsel %vm112, %v109, %v111
    %v114 = vsel %vm112, %v111, %v109
    %s115 = scalar_lea.vmem [#allocation5], 8
    %v116 = vld [vmem:[%s115] sm:$0xff]
    %118 = vst [vmem:[#allocation1] ss:$2 sm:$0xff] %v116
    %v119 = vld.sshfl [vmem:[#allocation1] sm:$0xff pattern:$0x75316420]
    %v120 = vld.sshfl [vmem:[#allocation1 + $0x8] sm:$0xff pattern:$0x75316420]
    %v123 = vmul.f32 %v114, %v119
    %v124 = vmul.f32 %v113, %v120
    %v127 = vrot.slane %v124, 4
    %v128 = vsel %vm99, %v123, %v127
    %v130 = vadd.f32 %v102, %v128
    %131 = vst [vmem:[#allocation1] ss:$2 sm:$0xff] %v68
    %v132 = vld.sshfl [vmem:[#allocation1] sm:$0xff pattern:$0x75316420]
    %v133 = vld.sshfl [vmem:[#allocation1 + $0x8] sm:$0xff pattern:$0x75316420]
    %136 = vrot.lane.b32.xlu0 %v132, 15
    %v137 = vpop.permute.xlu0 %136
    %138 = vrot.lane.b32.xlu0 %v133, 15
    %v139 = vpop.permute.xlu0 %138
    %vm140 = vcmp.lt.s32.totalorder %v83, 15
    %v141 = vsel %vm140, %v137, %v139
    %v142 = vsel %vm140, %v139, %v137
    %s143 = scalar_lea.vmem [#allocation5], 16
    %v144 = vld [vmem:[%s143] sm:$0xff]
    %146 = vst [vmem:[#allocation1] ss:$2 sm:$0xff] %v144
    %v147 = vld.sshfl [vmem:[#allocation1] sm:$0xff pattern:$0x75316420]
    %v148 = vld.sshfl [vmem:[#allocation1 + $0x8] sm:$0xff pattern:$0x75316420]
    %v151 = vmul.f32 %v142, %v147
    %v152 = vmul.f32 %v141, %v148
    %v155 = vrot.slane %v152, 4
    %v156 = vsel %vm99, %v151, %v155
    %v158 = vadd.f32 %v130, %v156
    %159 = vst [vmem:[#allocation1] ss:$2 sm:$0xff] %v68
    %v160 = vld.sshfl [vmem:[#allocation1] sm:$0xff pattern:$0x75316420]
    %v161 = vld.sshfl [vmem:[#allocation1 + $0x8] sm:$0xff pattern:$0x75316420]
    %164 = vrot.lane.b32.xlu0 %v160, 1
    %v165 = vpop.permute.xlu0 %164
    %166 = vrot.lane.b32.xlu0 %v161, 1
    %v167 = vpop.permute.xlu0 %166
    %vm168 = vcmp.lt.s32.totalorder %v83, 1
    %v169 = vsel %vm168, %v165, %v167
    %v170 = vsel %vm168, %v167, %v165
    %s171 = scalar_lea.vmem [#allocation5], 24
    %v172 = vld [vmem:[%s171] sm:$0xff]
    %174 = vst [vmem:[#allocation1] ss:$2 sm:$0xff] %v172
    %v175 = vld.sshfl [vmem:[#allocation1] sm:$0xff pattern:$0x75316420]
    %v176 = vld.sshfl [vmem:[#allocation1 + $0x8] sm:$0xff pattern:$0x75316420]
    %v179 = vmul.f32 %v170, %v175
    %v180 = vmul.f32 %v169, %v176
    %v183 = vrot.slane %v180, 4
    %v184 = vsel %vm99, %v179, %v183
    %v186 = vadd.f32 %v158, %v184
    %187 = vst [vmem:[#allocation1] ss:$2 sm:$0xff] %v68
    %v188 = vld.sshfl [vmem:[#allocation1] sm:$0xff pattern:$0x75316420]
    %v189 = vld.sshfl [vmem:[#allocation1 + $0x8] sm:$0xff pattern:$0x75316420]
    %192 = vrot.lane.b32.xlu0 %v188, 127
    %v193 = vpop.permute.xlu0 %192
    %194 = vrot.lane.b32.xlu0 %v189, 127
    %v195 = vpop.permute.xlu0 %194
    %vm196 = vcmp.lt.s32.totalorder %v83, 127
    %v197 = vsel %vm196, %v193, %v195
    %v198 = vsel %vm196, %v195, %v193
    %s199 = scalar_lea.vmem [#allocation5], 40
    %v200 = vld [vmem:[%s199] sm:$0xff]
    %202 = vst [vmem:[#allocation1] ss:$2 sm:$0xff] %v200
    %v203 = vld.sshfl [vmem:[#allocation1] sm:$0xff pattern:$0x75316420]
    %v204 = vld.sshfl [vmem:[#allocation1 + $0x8] sm:$0xff pattern:$0x75316420]
    %v207 = vmul.f32 %v197, %v203
    %v208 = vmul.f32 %v198, %v204
    %v211 = vrot.slane %v208, 4
    %v212 = vsel %vm99, %v207, %v211
    %v214 = vadd.f32 %v186, %v212
    %215 = vst [vmem:[#allocation1] ss:$2 sm:$0xff] %v68
    %v216 = vld.sshfl [vmem:[#allocation1] sm:$0xff pattern:$0x75316420]
    %v217 = vld.sshfl [vmem:[#allocation1 + $0x8] sm:$0xff pattern:$0x75316420]
    %220 = vrot.lane.b32.xlu0 %v216, 113
    %v221 = vpop.permute.xlu0 %220
    %222 = vrot.lane.b32.xlu0 %v217, 113
    %v223 = vpop.permute.xlu0 %222
    %vm224 = vcmp.lt.s32.totalorder %v83, 113
    %v225 = vsel %vm224, %v221, %v223
    %v226 = vsel %vm224, %v223, %v221
    %s227 = scalar_lea.vmem [#allocation5], 48
    %v228 = vld [vmem:[%s227] sm:$0xff]
    %230 = vst [vmem:[#allocation1] ss:$2 sm:$0xff] %v228
    %v231 = vld.sshfl [vmem:[#allocation1] sm:$0xff pattern:$0x75316420]
    %v232 = vld.sshfl [vmem:[#allocation1 + $0x8] sm:$0xff pattern:$0x75316420]
    %v235 = vmul.f32 %v225, %v231
    %v236 = vmul.f32 %v226, %v232
    %v239 = vrot.slane %v236, 4
    %v240 = vsel %vm99, %v235, %v239
    %v242 = vadd.f32 %v214, %v240
    %243 = vst [vmem:[#allocation1] ss:$2 sm:$0xff] %v68
    %v244 = vld.sshfl [vmem:[#allocation1] sm:$0xff pattern:$0x75316420]
    %v245 = vld.sshfl [vmem:[#allocation1 + $0x8] sm:$0xff pattern:$0x75316420]
    %248 = vrot.lane.b32.xlu0 %v244, 112
    %v249 = vpop.permute.xlu0 %248
    %250 = vrot.lane.b32.xlu0 %v245, 112
    %v251 = vpop.permute.xlu0 %250
    %vm252 = vcmp.lt.s32.totalorder %v83, 112
    %v253 = vsel %vm252, %v249, %v251
    %v254 = vsel %vm252, %v251, %v249
    %s255 = scalar_lea.vmem [#allocation5], 56
    %v256 = vld [vmem:[%s255] sm:$0xff]
    %258 = vst [vmem:[#allocation1] ss:$2 sm:$0xff] %v256
    %v259 = vld.sshfl [vmem:[#allocation1] sm:$0xff pattern:$0x75316420]
    %v260 = vld.sshfl [vmem:[#allocation1 + $0x8] sm:$0xff pattern:$0x75316420]
    %v263 = vmul.f32 %v253, %v259
    %v264 = vmul.f32 %v254, %v260
    %v267 = vrot.slane %v264, 4
    %v268 = vsel %vm99, %v263, %v267
    %v270 = vadd.f32 %v242, %v268
    %271 = vst [vmem:[#allocation1] ss:$2 sm:$0xff] %v68
    %v272 = vld.sshfl [vmem:[#allocation1] sm:$0xff pattern:$0x75316420]
    %v273 = vld.sshfl [vmem:[#allocation1 + $0x8] sm:$0xff pattern:$0x75316420]
    %276 = vrot.lane.b32.xlu0 %v272, 111
    %v277 = vpop.permute.xlu0 %276
    %278 = vrot.lane.b32.xlu0 %v273, 111
    %v279 = vpop.permute.xlu0 %278
    %vm280 = vcmp.lt.s32.totalorder %v83, 111
    %v281 = vsel %vm280, %v277, %v279
    %v282 = vsel %vm280, %v279, %v277
    %s283 = scalar_lea.vmem [#allocation5], 64
    %v284 = vld [vmem:[%s283] sm:$0xff]
    %286 = vst [vmem:[#allocation1] ss:$2 sm:$0xff] %v284
    %v287 = vld.sshfl [vmem:[#allocation1] sm:$0xff pattern:$0x75316420]
    %v288 = vld.sshfl [vmem:[#allocation1 + $0x8] sm:$0xff pattern:$0x75316420]
    %v291 = vmul.f32 %v281, %v287
    %v292 = vmul.f32 %v282, %v288
    %v295 = vrot.slane %v292, 4
    %v296 = vsel %vm99, %v291, %v295
    %v298 = vadd.f32 %v270, %v296
    %v299 = vld [vmem:[%s5] sm:$0xff]
    %v300 = vld [vmem:[%s5 + $0x8] sm:$0xff]
    %302 = vset.pattern.permute.xlu0 12
    %303 = vperm.xlu0 %302, %v299
    %v304 = vpop.permute.xlu0 %303
    %307 = vset.pattern.permute.xlu0 12
    %308 = vperm.xlu0 %307, %v300
    %v309 = vpop.permute.xlu0 %308
    %312 = vst [vmem:[#allocation1] ss:$2 sm:$0xff] %v298
    %v313 = vld.sshfl [vmem:[#allocation1] sm:$0xff pattern:$0x75316420]
    %v314 = vld.sshfl [vmem:[#allocation1 + $0x8] sm:$0xff pattern:$0x75316420]
    %vm315 = vcmask 31744
    %v316 = vsel %vm315, %v299, 0
    %v318 = vsel %vm315, %v300, 0
    %v320 = vsel %vm99, %v313, 0
    %v322 = vsel %vm99, %v314, 0
    %324 = vmatpush.msra.mxu0 0.0
    %325 = vmatpush.msra.mxu0 0.0
    %326 = vmatpush.msra.mxu0 0.0
    %327 = vmatpush.msra.mxu0 0.0
    %328 = vmatpush.msra.mxu0 0.0
    %329 = vmatpush.msra.mxu0 0.0
    %330 = vmatpush.msra.mxu0 0.0
    %331 = vmatpush.msra.mxu0 0.0
    %332 = vmatpush.msra.mxu0 0.0
    %333 = vmatpush.msra.mxu0 0.0
    %334 = vmatpush.msra.mxu0 0.0
    %335 = vmatpush.msra.mxu0 0.0
    %336 = vmatpush.msra.mxu0 0.0
    %337 = vmatpush.msra.mxu0 0.0
    %338 = vmatpush.msra.mxu0 0.0
    %339 = vmatpush.msra.mxu0 %v320
    %340 = vmatmul.f32.gmra.mxu0 %v316
    %v341 = vpop.f32.mrf.mxu0
    %v342 = vadd.f32 %v304, %v341
    %343 = vmatmul.f32.gmra.mxu0 %v318
    %v344 = vpop.f32.mrf.mxu0
    %v345 = vadd.f32 %v309, %v344
    %346 = vdwg.mxu0
    %347 = vmatpush.msra.mxu0 0.0
    %348 = vmatpush.msra.mxu0 0.0
    %349 = vmatpush.msra.mxu0 0.0
    %350 = vmatpush.msra.mxu0 0.0
    %351 = vmatpush.msra.mxu0 0.0
    %352 = vmatpush.msra.mxu0 0.0
    %353 = vmatpush.msra.mxu0 0.0
    %354 = vmatpush.msra.mxu0 0.0
    %355 = vmatpush.msra.mxu0 0.0
    %356 = vmatpush.msra.mxu0 0.0
    %357 = vmatpush.msra.mxu0 0.0
    %358 = vmatpush.msra.mxu0 0.0
    %359 = vmatpush.msra.mxu0 0.0
    %360 = vmatpush.msra.mxu0 0.0
    %361 = vmatpush.msra.mxu0 0.0
    %362 = vmatpush.msra.mxu0 %v322
    %363 = vmatmul.f32.gmra.mxu0 %v316
    %v364 = vpop.f32.mrf.mxu0
    %v365 = vadd.f32 %v304, %v364
    %366 = vmatmul.f32.gmra.mxu0 %v318
    %v367 = vpop.f32.mrf.mxu0
    %v368 = vadd.f32 %v309, %v367
    %369 = vdwg.mxu0
    %vm370 = vcmp.ge.f32.partialorder %v342, 0.0
    %vm371 = vcmp.ge.f32.partialorder %v365, 0.0
    %vm372 = vcmp.ge.f32.partialorder %v345, 0.0
    %vm373 = vcmp.ge.f32.partialorder %v368, 0.0
    %s374 = sld [smem:[#allocation2]]
    %v375 = vstv %s374
    %v376 = vmul.f32 %v375, %v342
    %v377 = vmul.f32 %v375, %v365
    %v378 = vmul.f32 %v375, %v345
    %v379 = vmul.f32 %v375, %v368
    %v380 = vsel %vm370, %v342, %v376
    %v381 = vsel %vm371, %v365, %v377
    %v382 = vsel %vm372, %v345, %v378
    %v383 = vsel %vm373, %v368, %v379
    %s384 = scalar_lea.vmem %s3, 128
    %v385 = vld [vmem:[%s384] sm:$0xff]
    %v386 = vld [vmem:[%s384 + $0x8] sm:$0xff]
    %v387 = vld [vmem:[%s384 + $0x10] sm:$0xf]
    %v388 = vld [vmem:[%s384 + $0x18] sm:$0xf]
    %v389 = vmul.f32 %v380, %v385
    %v390 = vmul.f32 %v381, %v386
    %v391 = vmul.f32 %v382, %v387
    %v392 = vmul.f32 %v383, %v388
    %393 = vrot.lane.b32.xlu0 %v380, 17
    %v394 = vpop.permute.xlu0 %393
    %395 = vrot.lane.b32.xlu0 %v382, 17
    %v396 = vpop.permute.xlu0 %395
    %397 = vrot.lane.b32.xlu0 %v381, 17
    %v398 = vpop.permute.xlu0 %397
    %399 = vrot.lane.b32.xlu0 %v383, 17
    %v400 = vpop.permute.xlu0 %399
    %v401 = vsel %vm84, %v394, %v398
    %v402 = vsel %vm84, %v396, %v400
    %v403 = vsel %vm84, %v398, %v394
    %v404 = vsel %vm84, %v400, %v396
    %v405 = vld [vmem:[%s3] sm:$0xff]
    %v406 = vld [vmem:[%s3 + $0x8] sm:$0xff]
    %v407 = vld [vmem:[%s3 + $0x10] sm:$0xf]
    %v408 = vld [vmem:[%s3 + $0x18] sm:$0xf]
    %v409 = vmul.f32 %v403, %v405
    %v410 = vmul.f32 %v401, %v406
    %v411 = vmul.f32 %v404, %v407
    %v412 = vmul.f32 %v402, %v408
    %v413 = vadd.f32 %v389, %v409
    %v414 = vadd.f32 %v390, %v410
    %v415 = vadd.f32 %v391, %v411
    %v416 = vadd.f32 %v392, %v412
    %417 = vrot.lane.b32.xlu0 %v380, 16
    %v418 = vpop.permute.xlu0 %417
    %419 = vrot.lane.b32.xlu0 %v382, 16
    %v420 = vpop.permute.xlu0 %419
    %421 = vrot.lane.b32.xlu0 %v381, 16
    %v422 = vpop.permute.xlu0 %421
    %423 = vrot.lane.b32.xlu0 %v383, 16
    %v424 = vpop.permute.xlu0 %423
    %v425 = vsel %vm112, %v418, %v422
    %v426 = vsel %vm112, %v420, %v424
    %v427 = vsel %vm112, %v422, %v418
    %v428 = vsel %vm112, %v424, %v420
    %s429 = scalar_lea.vmem %s3, 32
    %v430 = vld [vmem:[%s429] sm:$0xff]
    %v431 = vld [vmem:[%s429 + $0x8] sm:$0xff]
    %v432 = vld [vmem:[%s429 + $0x10] sm:$0xf]
    %v433 = vld [vmem:[%s429 + $0x18] sm:$0xf]
    %v434 = vmul.f32 %v427, %v430
    %v435 = vmul.f32 %v425, %v431
    %v436 = vmul.f32 %v428, %v432
    %v437 = vmul.f32 %v426, %v433
    %v438 = vadd.f32 %v413, %v434
    %v439 = vadd.f32 %v414, %v435
    %v440 = vadd.f32 %v415, %v436
    %v441 = vadd.f32 %v416, %v437
    %442 = vrot.lane.b32.xlu0 %v380, 15
    %v443 = vpop.permute.xlu0 %442
    %444 = vrot.lane.b32.xlu0 %v382, 15
    %v445 = vpop.permute.xlu0 %444
    %446 = vrot.lane.b32.xlu0 %v381, 15
    %v447 = vpop.permute.xlu0 %446
    %448 = vrot.lane.b32.xlu0 %v383, 15
    %v449 = vpop.permute.xlu0 %448
    %v450 = vsel %vm140, %v443, %v447
    %v451 = vsel %vm140, %v445, %v449
    %v452 = vsel %vm140, %v447, %v443
    %v453 = vsel %vm140, %v449, %v445
    %s454 = scalar_lea.vmem %s3, 64
    %v455 = vld [vmem:[%s454] sm:$0xff]
    %v456 = vld [vmem:[%s454 + $0x8] sm:$0xff]
    %v457 = vld [vmem:[%s454 + $0x10] sm:$0xf]
    %v458 = vld [vmem:[%s454 + $0x18] sm:$0xf]
    %v459 = vmul.f32 %v452, %v455
    %v460 = vmul.f32 %v450, %v456
    %v461 = vmul.f32 %v453, %v457
    %v462 = vmul.f32 %v451, %v458
    %v463 = vadd.f32 %v438, %v459
    %v464 = vadd.f32 %v439, %v460
    %v465 = vadd.f32 %v440, %v461
    %v466 = vadd.f32 %v441, %v462
    %467 = vrot.lane.b32.xlu0 %v380, 1
    %v468 = vpop.permute.xlu0 %467
    %469 = vrot.lane.b32.xlu0 %v382, 1
    %v470 = vpop.permute.xlu0 %469
    %471 = vrot.lane.b32.xlu0 %v381, 1
    %v472 = vpop.permute.xlu0 %471
    %473 = vrot.lane.b32.xlu0 %v383, 1
    %v474 = vpop.permute.xlu0 %473
    %v475 = vsel %vm168, %v468, %v472
    %v476 = vsel %vm168, %v470, %v474
    %v477 = vsel %vm168, %v472, %v468
    %v478 = vsel %vm168, %v474, %v470
    %s479 = scalar_lea.vmem %s3, 96
    %v480 = vld [vmem:[%s479] sm:$0xff]
    %v481 = vld [vmem:[%s479 + $0x8] sm:$0xff]
    %v482 = vld [vmem:[%s479 + $0x10] sm:$0xf]
    %v483 = vld [vmem:[%s479 + $0x18] sm:$0xf]
    %v484 = vmul.f32 %v477, %v480
    %v485 = vmul.f32 %v475, %v481
    %v486 = vmul.f32 %v478, %v482
    %v487 = vmul.f32 %v476, %v483
    %v488 = vadd.f32 %v463, %v484
    %v489 = vadd.f32 %v464, %v485
    %v490 = vadd.f32 %v465, %v486
    %v491 = vadd.f32 %v466, %v487
    %492 = vrot.lane.b32.xlu0 %v380, 127
    %v493 = vpop.permute.xlu0 %492
    %494 = vrot.lane.b32.xlu0 %v382, 127
    %v495 = vpop.permute.xlu0 %494
    %496 = vrot.lane.b32.xlu0 %v381, 127
    %v497 = vpop.permute.xlu0 %496
    %498 = vrot.lane.b32.xlu0 %v383, 127
    %v499 = vpop.permute.xlu0 %498
    %v500 = vsel %vm196, %v493, %v497
    %v501 = vsel %vm196, %v495, %v499
    %v502 = vsel %vm196, %v497, %v493
    %v503 = vsel %vm196, %v499, %v495
    %s504 = scalar_lea.vmem %s3, 160
    %v505 = vld [vmem:[%s504] sm:$0xff]
    %v506 = vld [vmem:[%s504 + $0x8] sm:$0xff]
    %v507 = vld [vmem:[%s504 + $0x10] sm:$0xf]
    %v508 = vld [vmem:[%s504 + $0x18] sm:$0xf]
    %v509 = vmul.f32 %v500, %v505
    %v510 = vmul.f32 %v502, %v506
    %v511 = vmul.f32 %v501, %v507
    %v512 = vmul.f32 %v503, %v508
    %v513 = vadd.f32 %v488, %v509
    %v514 = vadd.f32 %v489, %v510
    %v515 = vadd.f32 %v490, %v511
    %v516 = vadd.f32 %v491, %v512
    %517 = vrot.lane.b32.xlu0 %v380, 113
    %v518 = vpop.permute.xlu0 %517
    %519 = vrot.lane.b32.xlu0 %v382, 113
    %v520 = vpop.permute.xlu0 %519
    %521 = vrot.lane.b32.xlu0 %v381, 113
    %v522 = vpop.permute.xlu0 %521
    %523 = vrot.lane.b32.xlu0 %v383, 113
    %v524 = vpop.permute.xlu0 %523
    %v525 = vsel %vm224, %v518, %v522
    %v526 = vsel %vm224, %v520, %v524
    %v527 = vsel %vm224, %v522, %v518
    %v528 = vsel %vm224, %v524, %v520
    %s529 = scalar_lea.vmem %s3, 192
    %v530 = vld [vmem:[%s529] sm:$0xff]
    %v531 = vld [vmem:[%s529 + $0x8] sm:$0xff]
    %v532 = vld [vmem:[%s529 + $0x10] sm:$0xf]
    %v533 = vld [vmem:[%s529 + $0x18] sm:$0xf]
    %v534 = vmul.f32 %v525, %v530
    %v535 = vmul.f32 %v527, %v531
    %v536 = vmul.f32 %v526, %v532
    %v537 = vmul.f32 %v528, %v533
    %v538 = vadd.f32 %v513, %v534
    %v539 = vadd.f32 %v514, %v535
    %v540 = vadd.f32 %v515, %v536
    %v541 = vadd.f32 %v516, %v537
    %542 = vrot.lane.b32.xlu0 %v380, 112
    %v543 = vpop.permute.xlu0 %542
    %544 = vrot.lane.b32.xlu0 %v382, 112
    %v545 = vpop.permute.xlu0 %544
    %546 = vrot.lane.b32.xlu0 %v381, 112
    %v547 = vpop.permute.xlu0 %546
    %548 = vrot.lane.b32.xlu0 %v383, 112
    %v549 = vpop.permute.xlu0 %548
    %v550 = vsel %vm252, %v543, %v547
    %v551 = vsel %vm252, %v545, %v549
    %v552 = vsel %vm252, %v547, %v543
    %v553 = vsel %vm252, %v549, %v545
    %s554 = scalar_lea.vmem %s3, 224
    %v555 = vld [vmem:[%s554] sm:$0xff]
    %v556 = vld [vmem:[%s554 + $0x8] sm:$0xff]
    %v557 = vld [vmem:[%s554 + $0x10] sm:$0xf]
    %v558 = vld [vmem:[%s554 + $0x18] sm:$0xf]
    %v559 = vmul.f32 %v550, %v555
    %v560 = vmul.f32 %v552, %v556
    %v561 = vmul.f32 %v551, %v557
    %v562 = vmul.f32 %v553, %v558
    %v563 = vadd.f32 %v538, %v559
    %v564 = vadd.f32 %v539, %v560
    %v565 = vadd.f32 %v540, %v561
    %v566 = vadd.f32 %v541, %v562
    %567 = vrot.lane.b32.xlu0 %v380, 111
    %v568 = vpop.permute.xlu0 %567
    %569 = vrot.lane.b32.xlu0 %v382, 111
    %v570 = vpop.permute.xlu0 %569
    %571 = vrot.lane.b32.xlu0 %v381, 111
    %v572 = vpop.permute.xlu0 %571
    %573 = vrot.lane.b32.xlu0 %v383, 111
    %v574 = vpop.permute.xlu0 %573
    %v575 = vsel %vm280, %v568, %v572
    %v576 = vsel %vm280, %v570, %v574
    %v577 = vsel %vm280, %v572, %v568
    %v578 = vsel %vm280, %v574, %v570
    %s579 = scalar_lea.vmem %s3, 256
    %v580 = vld [vmem:[%s579] sm:$0xff]
    %v581 = vld [vmem:[%s579 + $0x8] sm:$0xff]
    %v582 = vld [vmem:[%s579 + $0x10] sm:$0xf]
    %v583 = vld [vmem:[%s579 + $0x18] sm:$0xf]
    %v584 = vmul.f32 %v575, %v580
    %v585 = vmul.f32 %v577, %v581
    %v586 = vmul.f32 %v576, %v582
    %v587 = vmul.f32 %v578, %v583
    %v588 = vadd.f32 %v563, %v584
    %v589 = vadd.f32 %v564, %v585
    %v590 = vadd.f32 %v565, %v586
    %v591 = vadd.f32 %v566, %v587
    %s592 = scalar_lea.vmem %s5, 48
    %v593 = vld [vmem:[%s592] sm:$0xff]
    %v594 = vld [vmem:[%s592 + $0x8] sm:$0xff]
    %596 = vset.pattern.permute.xlu0 12
    %597 = vperm.xlu0 %596, %v593
    %v598 = vpop.permute.xlu0 %597
    %601 = vset.pattern.permute.xlu0 12
    %602 = vperm.xlu0 %601, %v594
    %v603 = vpop.permute.xlu0 %602
    %vm605 = vcmask 97280
    %v606 = vsel %vm605, %v593, 0
    %v608 = vsel %vm605, %v594, 0
    %v611 = vsel %vm99, %v590, 0
    %v614 = vsel %vm99, %v591, 0
    %616 = vmatpush.msra.mxu0 0.0
    %617 = vmatpush.msra.mxu0 0.0
    %618 = vmatpush.msra.mxu0 0.0
    %619 = vmatpush.msra.mxu0 0.0
    %620 = vmatpush.msra.mxu0 0.0
    %621 = vmatpush.msra.mxu0 0.0
    %622 = vmatpush.msra.mxu0 0.0
    %623 = vmatpush.msra.mxu0 0.0
    %624 = vmatpush.msra.mxu0 0.0
    %625 = vmatpush.msra.mxu0 0.0
    %626 = vmatpush.msra.mxu0 0.0
    %627 = vmatpush.msra.mxu0 0.0
    %628 = vmatpush.msra.mxu0 0.0
    %629 = vmatpush.msra.mxu0 0.0
    %630 = vmatpush.msra.mxu0 %v611
    %631 = vmatpush.msra.mxu0 %v588
    %632 = vmatmul.f32.gmra.mxu0 %v606
    %v633 = vpop.f32.mrf.mxu0
    %v634 = vadd.f32 %v598, %v633
    %635 = vmatmul.f32.gmra.mxu0 %v608
    %v636 = vpop.f32.mrf.mxu0
    %v637 = vadd.f32 %v603, %v636
    %638 = vdwg.mxu0
    %639 = vmatpush.msra.mxu0 0.0
    %640 = vmatpush.msra.mxu0 0.0
    %641 = vmatpush.msra.mxu0 0.0
    %642 = vmatpush.msra.mxu0 0.0
    %643 = vmatpush.msra.mxu0 0.0
    %644 = vmatpush.msra.mxu0 0.0
    %645 = vmatpush.msra.mxu0 0.0
    %646 = vmatpush.msra.mxu0 0.0
    %647 = vmatpush.msra.mxu0 0.0
    %648 = vmatpush.msra.mxu0 0.0
    %649 = vmatpush.msra.mxu0 0.0
    %650 = vmatpush.msra.mxu0 0.0
    %651 = vmatpush.msra.mxu0 0.0
    %652 = vmatpush.msra.mxu0 0.0
    %653 = vmatpush.msra.mxu0 %v614
    %654 = vmatpush.msra.mxu0 %v589
    %655 = vmatmul.f32.gmra.mxu0 %v606
    %v656 = vpop.f32.mrf.mxu0
    %v657 = vadd.f32 %v598, %v656
    %658 = vmatmul.f32.gmra.mxu0 %v608
    %v659 = vpop.f32.mrf.mxu0
    %v660 = vadd.f32 %v603, %v659
    %661 = vdwg.mxu0
    %vm662 = vcmp.ge.f32.partialorder %v634, 0.0
    %vm663 = vcmp.ge.f32.partialorder %v657, 0.0
    %vm664 = vcmp.ge.f32.partialorder %v637, 0.0
    %vm665 = vcmp.ge.f32.partialorder %v660, 0.0
    %s666 = sld [smem:[#allocation2 + $0x1]]
    %v667 = vstv %s666
    %v668 = vmul.f32 %v667, %v634
    %v669 = vmul.f32 %v667, %v657
    %v670 = vmul.f32 %v667, %v637
    %v671 = vmul.f32 %v667, %v660
    %v672 = vsel %vm662, %v634, %v668
    %v673 = vsel %vm663, %v657, %v669
    %v674 = vsel %vm664, %v637, %v670
    %v675 = vsel %vm665, %v660, %v671
    %s676 = scalar_lea.vmem [#allocation6], 128
    %v677 = vld [vmem:[%s676] sm:$0xff]
    %v678 = vld [vmem:[%s676 + $0x8] sm:$0xff]
    %v679 = vld [vmem:[%s676 + $0x10] sm:$0xf]
    %v680 = vld [vmem:[%s676 + $0x18] sm:$0xf]
    %v681 = vmul.f32 %v672, %v677
    %v682 = vmul.f32 %v673, %v678
    %v683 = vmul.f32 %v674, %v679
    %v684 = vmul.f32 %v675, %v680
    %685 = vrot.lane.b32.xlu0 %v672, 17
    %v686 = vpop.permute.xlu0 %685
    %687 = vrot.lane.b32.xlu0 %v674, 17
    %v688 = vpop.permute.xlu0 %687
    %689 = vrot.lane.b32.xlu0 %v673, 17
    %v690 = vpop.permute.xlu0 %689
    %691 = vrot.lane.b32.xlu0 %v675, 17
    %v692 = vpop.permute.xlu0 %691
    %v693 = vsel %vm84, %v686, %v690
    %v694 = vsel %vm84, %v688, %v692
    %v695 = vsel %vm84, %v690, %v686
    %v696 = vsel %vm84, %v692, %v688
    %v697 = vld [vmem:[#allocation6] sm:$0xff]
    %v698 = vld [vmem:[#allocation6 + $0x8] sm:$0xff]
    %v699 = vld [vmem:[#allocation6 + $0x10] sm:$0xf]
    %v700 = vld [vmem:[#allocation6 + $0x18] sm:$0xf]
    %v701 = vmul.f32 %v695, %v697
    %v702 = vmul.f32 %v693, %v698
    %v703 = vmul.f32 %v696, %v699
    %v704 = vmul.f32 %v694, %v700
    %v705 = vadd.f32 %v681, %v701
    %v706 = vadd.f32 %v682, %v702
    %v707 = vadd.f32 %v683, %v703
    %v708 = vadd.f32 %v684, %v704
    %709 = vrot.lane.b32.xlu0 %v672, 16
    %v710 = vpop.permute.xlu0 %709
    %711 = vrot.lane.b32.xlu0 %v674, 16
    %v712 = vpop.permute.xlu0 %711
    %713 = vrot.lane.b32.xlu0 %v673, 16
    %v714 = vpop.permute.xlu0 %713
    %715 = vrot.lane.b32.xlu0 %v675, 16
    %v716 = vpop.permute.xlu0 %715
    %v717 = vsel %vm112, %v710, %v714
    %v718 = vsel %vm112, %v712, %v716
    %v719 = vsel %vm112, %v714, %v710
    %v720 = vsel %vm112, %v716, %v712
    %s721 = scalar_lea.vmem [#allocation6], 32
    %v722 = vld [vmem:[%s721] sm:$0xff]
    %v723 = vld [vmem:[%s721 + $0x8] sm:$0xff]
    %v724 = vld [vmem:[%s721 + $0x10] sm:$0xf]
    %v725 = vld [vmem:[%s721 + $0x18] sm:$0xf]
    %v726 = vmul.f32 %v719, %v722
    %v727 = vmul.f32 %v717, %v723
    %v728 = vmul.f32 %v720, %v724
    %v729 = vmul.f32 %v718, %v725
    %v730 = vadd.f32 %v705, %v726
    %v731 = vadd.f32 %v706, %v727
    %v732 = vadd.f32 %v707, %v728
    %v733 = vadd.f32 %v708, %v729
    %734 = vrot.lane.b32.xlu0 %v672, 15
    %v735 = vpop.permute.xlu0 %734
    %736 = vrot.lane.b32.xlu0 %v674, 15
    %v737 = vpop.permute.xlu0 %736
    %738 = vrot.lane.b32.xlu0 %v673, 15
    %v739 = vpop.permute.xlu0 %738
    %740 = vrot.lane.b32.xlu0 %v675, 15
    %v741 = vpop.permute.xlu0 %740
    %v742 = vsel %vm140, %v735, %v739
    %v743 = vsel %vm140, %v737, %v741
    %v744 = vsel %vm140, %v739, %v735
    %v745 = vsel %vm140, %v741, %v737
    %s746 = scalar_lea.vmem [#allocation6], 64
    %v747 = vld [vmem:[%s746] sm:$0xff]
    %v748 = vld [vmem:[%s746 + $0x8] sm:$0xff]
    %v749 = vld [vmem:[%s746 + $0x10] sm:$0xf]
    %v750 = vld [vmem:[%s746 + $0x18] sm:$0xf]
    %v751 = vmul.f32 %v744, %v747
    %v752 = vmul.f32 %v742, %v748
    %v753 = vmul.f32 %v745, %v749
    %v754 = vmul.f32 %v743, %v750
    %v755 = vadd.f32 %v730, %v751
    %v756 = vadd.f32 %v731, %v752
    %v757 = vadd.f32 %v732, %v753
    %v758 = vadd.f32 %v733, %v754
    %759 = vrot.lane.b32.xlu0 %v672, 1
    %v760 = vpop.permute.xlu0 %759
    %761 = vrot.lane.b32.xlu0 %v674, 1
    %v762 = vpop.permute.xlu0 %761
    %763 = vrot.lane.b32.xlu0 %v673, 1
    %v764 = vpop.permute.xlu0 %763
    %765 = vrot.lane.b32.xlu0 %v675, 1
    %v766 = vpop.permute.xlu0 %765
    %v767 = vsel %vm168, %v760, %v764
    %v768 = vsel %vm168, %v762, %v766
    %v769 = vsel %vm168, %v764, %v760
    %v770 = vsel %vm168, %v766, %v762
    %s771 = scalar_lea.vmem [#allocation6], 96
    %v772 = vld [vmem:[%s771] sm:$0xff]
    %v773 = vld [vmem:[%s771 + $0x8] sm:$0xff]
    %v774 = vld [vmem:[%s771 + $0x10] sm:$0xf]
    %v775 = vld [vmem:[%s771 + $0x18] sm:$0xf]
    %v776 = vmul.f32 %v769, %v772
    %v777 = vmul.f32 %v767, %v773
    %v778 = vmul.f32 %v770, %v774
    %v779 = vmul.f32 %v768, %v775
    %v780 = vadd.f32 %v755, %v776
    %v781 = vadd.f32 %v756, %v777
    %v782 = vadd.f32 %v757, %v778
    %v783 = vadd.f32 %v758, %v779
    %784 = vrot.lane.b32.xlu0 %v672, 127
    %v785 = vpop.permute.xlu0 %784
    %786 = vrot.lane.b32.xlu0 %v674, 127
    %v787 = vpop.permute.xlu0 %786
    %788 = vrot.lane.b32.xlu0 %v673, 127
    %v789 = vpop.permute.xlu0 %788
    %790 = vrot.lane.b32.xlu0 %v675, 127
    %v791 = vpop.permute.xlu0 %790
    %v792 = vsel %vm196, %v785, %v789
    %v793 = vsel %vm196, %v787, %v791
    %v794 = vsel %vm196, %v789, %v785
    %v795 = vsel %vm196, %v791, %v787
    %s796 = scalar_lea.vmem [#allocation6], 160
    %v797 = vld [vmem:[%s796] sm:$0xff]
    %v798 = vld [vmem:[%s796 + $0x8] sm:$0xff]
    %v799 = vld [vmem:[%s796 + $0x10] sm:$0xf]
    %v800 = vld [vmem:[%s796 + $0x18] sm:$0xf]
    %v801 = vmul.f32 %v792, %v797
    %v802 = vmul.f32 %v794, %v798
    %v803 = vmul.f32 %v793, %v799
    %v804 = vmul.f32 %v795, %v800
    %v805 = vadd.f32 %v780, %v801
    %v806 = vadd.f32 %v781, %v802
    %v807 = vadd.f32 %v782, %v803
    %v808 = vadd.f32 %v783, %v804
    %809 = vrot.lane.b32.xlu0 %v672, 113
    %v810 = vpop.permute.xlu0 %809
    %811 = vrot.lane.b32.xlu0 %v674, 113
    %v812 = vpop.permute.xlu0 %811
    %813 = vrot.lane.b32.xlu0 %v673, 113
    %v814 = vpop.permute.xlu0 %813
    %815 = vrot.lane.b32.xlu0 %v675, 113
    %v816 = vpop.permute.xlu0 %815
    %v817 = vsel %vm224, %v810, %v814
    %v818 = vsel %vm224, %v812, %v816
    %v819 = vsel %vm224, %v814, %v810
    %v820 = vsel %vm224, %v816, %v812
    %s821 = scalar_lea.vmem [#allocation6], 192
    %v822 = vld [vmem:[%s821] sm:$0xff]
    %v823 = vld [vmem:[%s821 + $0x8] sm:$0xff]
    %v824 = vld [vmem:[%s821 + $0x10] sm:$0xf]
    %v825 = vld [vmem:[%s821 + $0x18] sm:$0xf]
    %v826 = vmul.f32 %v817, %v822
    %v827 = vmul.f32 %v819, %v823
    %v828 = vmul.f32 %v818, %v824
    %v829 = vmul.f32 %v820, %v825
    %v830 = vadd.f32 %v805, %v826
    %v831 = vadd.f32 %v806, %v827
    %v832 = vadd.f32 %v807, %v828
    %v833 = vadd.f32 %v808, %v829
    %834 = vrot.lane.b32.xlu0 %v672, 112
    %v835 = vpop.permute.xlu0 %834
    %836 = vrot.lane.b32.xlu0 %v674, 112
    %v837 = vpop.permute.xlu0 %836
    %838 = vrot.lane.b32.xlu0 %v673, 112
    %v839 = vpop.permute.xlu0 %838
    %840 = vrot.lane.b32.xlu0 %v675, 112
    %v841 = vpop.permute.xlu0 %840
    %v842 = vsel %vm252, %v835, %v839
    %v843 = vsel %vm252, %v837, %v841
    %v844 = vsel %vm252, %v839, %v835
    %v845 = vsel %vm252, %v841, %v837
    %s846 = scalar_lea.vmem [#allocation6], 224
    %v847 = vld [vmem:[%s846] sm:$0xff]
    %v848 = vld [vmem:[%s846 + $0x8] sm:$0xff]
    %v849 = vld [vmem:[%s846 + $0x10] sm:$0xf]
    %v850 = vld [vmem:[%s846 + $0x18] sm:$0xf]
    %v851 = vmul.f32 %v842, %v847
    %v852 = vmul.f32 %v844, %v848
    %v853 = vmul.f32 %v843, %v849
    %v854 = vmul.f32 %v845, %v850
    %v855 = vadd.f32 %v830, %v851
    %v856 = vadd.f32 %v831, %v852
    %v857 = vadd.f32 %v832, %v853
    %v858 = vadd.f32 %v833, %v854
    %859 = vrot.lane.b32.xlu0 %v672, 111
    %v860 = vpop.permute.xlu0 %859
    %861 = vrot.lane.b32.xlu0 %v674, 111
    %v862 = vpop.permute.xlu0 %861
    %863 = vrot.lane.b32.xlu0 %v673, 111
    %v864 = vpop.permute.xlu0 %863
    %865 = vrot.lane.b32.xlu0 %v675, 111
    %v866 = vpop.permute.xlu0 %865
    %v867 = vsel %vm280, %v860, %v864
    %v868 = vsel %vm280, %v862, %v866
    %v869 = vsel %vm280, %v864, %v860
    %v870 = vsel %vm280, %v866, %v862
    %s871 = scalar_lea.vmem [#allocation6], 256
    %v872 = vld [vmem:[%s871] sm:$0xff]
    %v873 = vld [vmem:[%s871 + $0x8] sm:$0xff]
    %v874 = vld [vmem:[%s871 + $0x10] sm:$0xf]
    %v875 = vld [vmem:[%s871 + $0x18] sm:$0xf]
    %v876 = vmul.f32 %v867, %v872
    %v877 = vmul.f32 %v869, %v873
    %v878 = vmul.f32 %v868, %v874
    %v879 = vmul.f32 %v870, %v875
    %v880 = vadd.f32 %v855, %v876
    %v881 = vadd.f32 %v856, %v877
    %v882 = vadd.f32 %v857, %v878
    %v883 = vadd.f32 %v858, %v879
    %s884 = scalar_lea.vmem %s5, 96
    %v885 = vld [vmem:[%s884] sm:$0xff]
    %v886 = vld [vmem:[%s884 + $0x8] sm:$0xff]
    %v887 = vld [vmem:[%s884 + $0x10] sm:$0xff]
    %v888 = vld [vmem:[%s884 + $0x18] sm:$0xff]
    %v889 = vld [vmem:[%s884 + $0x20] sm:$0xff]
    %v890 = vld [vmem:[%s884 + $0x28] sm:$0xff]
    %892 = vset.pattern.permute.xlu0 12
    %893 = vperm.xlu0 %892, %v885
    %v894 = vpop.permute.xlu0 %893
    %897 = vset.pattern.permute.xlu0 12
    %898 = vperm.xlu0 %897, %v886
    %v899 = vpop.permute.xlu0 %898
    %902 = vset.pattern.permute.xlu0 12
    %903 = vperm.xlu0 %902, %v887
    %v904 = vpop.permute.xlu0 %903
    %907 = vset.pattern.permute.xlu0 12
    %908 = vperm.xlu0 %907, %v888
    %v909 = vpop.permute.xlu0 %908
    %912 = vset.pattern.permute.xlu0 12
    %913 = vperm.xlu0 %912, %v889
    %v914 = vpop.permute.xlu0 %913
    %917 = vset.pattern.permute.xlu0 12
    %918 = vperm.xlu0 %917, %v890
    %v919 = vpop.permute.xlu0 %918
    %v921 = vsel %vm605, %v885, 0
    %v923 = vsel %vm605, %v886, 0
    %v925 = vsel %vm605, %v887, 0
    %v927 = vsel %vm605, %v888, 0
    %v929 = vsel %vm605, %v889, 0
    %v931 = vsel %vm605, %v890, 0
    %v934 = vsel %vm99, %v882, 0
    %v937 = vsel %vm99, %v883, 0
    %939 = vmatpush.msra.mxu0 0.0
    %940 = vmatpush.msra.mxu0 0.0
    %941 = vmatpush.msra.mxu0 0.0
    %942 = vmatpush.msra.mxu0 0.0
    %943 = vmatpush.msra.mxu0 0.0
    %944 = vmatpush.msra.mxu0 0.0
    %945 = vmatpush.msra.mxu0 0.0
    %946 = vmatpush.msra.mxu0 0.0
    %947 = vmatpush.msra.mxu0 0.0
    %948 = vmatpush.msra.mxu0 0.0
    %949 = vmatpush.msra.mxu0 0.0
    %950 = vmatpush.msra.mxu0 0.0
    %951 = vmatpush.msra.mxu0 0.0
    %952 = vmatpush.msra.mxu0 0.0
    %953 = vmatpush.msra.mxu0 %v934
    %954 = vmatpush.msra.mxu0 %v880
    %955 = vmatmul.f32.gmra.mxu0 %v921
    %v956 = vpop.f32.mrf.mxu0
    %v957 = vadd.f32 %v894, %v956
    %958 = vmatmul.f32.gmra.mxu0 %v923
    %v959 = vpop.f32.mrf.mxu0
    %v960 = vadd.f32 %v899, %v959
    %961 = vmatmul.f32.gmra.mxu0 %v925
    %v962 = vpop.f32.mrf.mxu0
    %v963 = vadd.f32 %v904, %v962
    %964 = vmatmul.f32.gmra.mxu0 %v927
    %v965 = vpop.f32.mrf.mxu0
    %v966 = vadd.f32 %v909, %v965
    %967 = vmatmul.f32.gmra.mxu0 %v929
    %v968 = vpop.f32.mrf.mxu0
    %v969 = vadd.f32 %v914, %v968
    %970 = vmatmul.f32.gmra.mxu0 %v931
    %v971 = vpop.f32.mrf.mxu0
    %v972 = vadd.f32 %v919, %v971
    %973 = vdwg.mxu0
    %974 = vmatpush.msra.mxu0 0.0
    %975 = vmatpush.msra.mxu0 0.0
    %976 = vmatpush.msra.mxu0 0.0
    %977 = vmatpush.msra.mxu0 0.0
    %978 = vmatpush.msra.mxu0 0.0
    %979 = vmatpush.msra.mxu0 0.0
    %980 = vmatpush.msra.mxu0 0.0
    %981 = vmatpush.msra.mxu0 0.0
    %982 = vmatpush.msra.mxu0 0.0
    %983 = vmatpush.msra.mxu0 0.0
    %984 = vmatpush.msra.mxu0 0.0
    %985 = vmatpush.msra.mxu0 0.0
    %986 = vmatpush.msra.mxu0 0.0
    %987 = vmatpush.msra.mxu0 0.0
    %988 = vmatpush.msra.mxu0 %v937
    %989 = vmatpush.msra.mxu0 %v881
    %990 = vmatmul.f32.gmra.mxu0 %v921
    %v991 = vpop.f32.mrf.mxu0
    %v992 = vadd.f32 %v894, %v991
    %993 = vmatmul.f32.gmra.mxu0 %v923
    %v994 = vpop.f32.mrf.mxu0
    %v995 = vadd.f32 %v899, %v994
    %996 = vmatmul.f32.gmra.mxu0 %v925
    %v997 = vpop.f32.mrf.mxu0
    %v998 = vadd.f32 %v904, %v997
    %999 = vmatmul.f32.gmra.mxu0 %v927
    %v1000 = vpop.f32.mrf.mxu0
    %v1001 = vadd.f32 %v909, %v1000
    %1002 = vmatmul.f32.gmra.mxu0 %v929
    %v1003 = vpop.f32.mrf.mxu0
    %v1004 = vadd.f32 %v914, %v1003
    %1005 = vmatmul.f32.gmra.mxu0 %v931
    %v1006 = vpop.f32.mrf.mxu0
    %v1007 = vadd.f32 %v919, %v1006
    %1008 = vdwg.mxu0
    %vm1009 = vcmp.ge.f32.partialorder %v957, 0.0
    %vm1010 = vcmp.ge.f32.partialorder %v992, 0.0
    %vm1011 = vcmp.ge.f32.partialorder %v960, 0.0
    %vm1012 = vcmp.ge.f32.partialorder %v995, 0.0
    %vm1013 = vcmp.ge.f32.partialorder %v963, 0.0
    %vm1014 = vcmp.ge.f32.partialorder %v998, 0.0
    %vm1015 = vcmp.ge.f32.partialorder %v966, 0.0
    %vm1016 = vcmp.ge.f32.partialorder %v1001, 0.0
    %vm1017 = vcmp.ge.f32.partialorder %v969, 0.0
    %vm1018 = vcmp.ge.f32.partialorder %v1004, 0.0
    %vm1019 = vcmp.ge.f32.partialorder %v972, 0.0
    %vm1020 = vcmp.ge.f32.partialorder %v1007, 0.0
    %s1021 = sld [smem:[#allocation2 + $0x2]]
    %v1022 = vstv %s1021
    %v1023 = vmul.f32 %v1022, %v957
    %v1024 = vmul.f32 %v1022, %v992
    %v1025 = vmul.f32 %v1022, %v960
    %v1026 = vmul.f32 %v1022, %v995
    %v1027 = vmul.f32 %v1022, %v963
    %v1028 = vmul.f32 %v1022, %v998
    %v1029 = vmul.f32 %v1022, %v966
    %v1030 = vmul.f32 %v1022, %v1001
    %v1031 = vmul.f32 %v1022, %v969
    %v1032 = vmul.f32 %v1022, %v1004
    %v1033 = vmul.f32 %v1022, %v972
    %v1034 = vmul.f32 %v1022, %v1007
    %v1035 = vsel %vm1009, %v957, %v1023
    %v1036 = vsel %vm1010, %v992, %v1024
    %v1037 = vsel %vm1011, %v960, %v1025
    %v1038 = vsel %vm1012, %v995, %v1026
    %v1039 = vsel %vm1013, %v963, %v1027
    %v1040 = vsel %vm1014, %v998, %v1028
    %v1041 = vsel %vm1015, %v966, %v1029
    %v1042 = vsel %vm1016, %v1001, %v1030
    %v1043 = vsel %vm1017, %v969, %v1031
    %v1044 = vsel %vm1018, %v1004, %v1032
    %v1045 = vsel %vm1019, %v972, %v1033
    %v1046 = vsel %vm1020, %v1007, %v1034
    %1047 = vst [vmem:[%s6] sm:$0xff] %v1035
    %1048 = vst [vmem:[%s6 + $0x8] sm:$0xff] %v1036
    %1049 = vst [vmem:[%s6 + $0x10] sm:$0xff] %v1037
    %1050 = vst [vmem:[%s6 + $0x18] sm:$0xff] %v1038
    %1051 = vst [vmem:[%s6 + $0x20] sm:$0xff] %v1039
    %1052 = vst [vmem:[%s6 + $0x28] sm:$0xff] %v1040
    %1053 = vst [vmem:[%s6 + $0x30] sm:$0xff] %v1041
    %1054 = vst [vmem:[%s6 + $0x38] sm:$0xff] %v1042
    %1055 = vst [vmem:[%s6 + $0x40] sm:$0xff] %v1043
    %1056 = vst [vmem:[%s6 + $0x48] sm:$0xff] %v1044
    %1057 = vst [vmem:[%s6 + $0x50] sm:$0xff] %v1045
    %1058 = vst [vmem:[%s6 + $0x58] sm:$0xff] %v1046
    %s1059 = scalar_lea.vmem %s1, 8
    %v1060 = vld [vmem:[%s1059] sm:$0xff]
    %v1061 = vld [vmem:[%s69] sm:$0xff]
    %v1062 = vmul.f32 %v1060, %v1061
    %1064 = vst [vmem:[#allocation1] ss:$2 sm:$0xff] %v1060
    %v1065 = vld.sshfl [vmem:[#allocation1] sm:$0xff pattern:$0x75316420]
    %v1066 = vld.sshfl [vmem:[#allocation1 + $0x8] sm:$0xff pattern:$0x75316420]
    %1069 = vrot.lane.b32.xlu0 %v1065, 17
    %v1070 = vpop.permute.xlu0 %1069
    %1071 = vrot.lane.b32.xlu0 %v1066, 17
    %v1072 = vpop.permute.xlu0 %1071
    %v1073 = vsel %vm84, %v1070, %v1072
    %v1074 = vsel %vm84, %v1072, %v1070
    %v1075 = vld [vmem:[#allocation5] sm:$0xff]
    %1077 = vst [vmem:[#allocation1] ss:$2 sm:$0xff] %v1075
    %v1078 = vld.sshfl [vmem:[#allocation1] sm:$0xff pattern:$0x75316420]
    %v1079 = vld.sshfl [vmem:[#allocation1 + $0x8] sm:$0xff pattern:$0x75316420]
    %v1082 = vmul.f32 %v1074, %v1078
    %v1083 = vmul.f32 %v1073, %v1079
    %v1086 = vrot.slane %v1083, 4
    %v1087 = vsel %vm99, %v1082, %v1086
    %v1089 = vadd.f32 %v1062, %v1087
    %1090 = vst [vmem:[#allocation1] ss:$2 sm:$0xff] %v1060
    %v1091 = vld.sshfl [vmem:[#allocation1] sm:$0xff pattern:$0x75316420]
    %v1092 = vld.sshfl [vmem:[#allocation1 + $0x8] sm:$0xff pattern:$0x75316420]
    %1095 = vrot.lane.b32.xlu0 %v1091, 16
    %v1096 = vpop.permute.xlu0 %1095
    %1097 = vrot.lane.b32.xlu0 %v1092, 16
    %v1098 = vpop.permute.xlu0 %1097
    %v1099 = vsel %vm112, %v1096, %v1098
    %v1100 = vsel %vm112, %v1098, %v1096
    %v1101 = vld [vmem:[%s115] sm:$0xff]
    %1103 = vst [vmem:[#allocation1] ss:$2 sm:$0xff] %v1101
    %v1104 = vld.sshfl [vmem:[#allocation1] sm:$0xff pattern:$0x75316420]
    %v1105 = vld.sshfl [vmem:[#allocation1 + $0x8] sm:$0xff pattern:$0x75316420]
    %v1108 = vmul.f32 %v1100, %v1104
    %v1109 = vmul.f32 %v1099, %v1105
    %v1112 = vrot.slane %v1109, 4
    %v1113 = vsel %vm99, %v1108, %v1112
    %v1115 = vadd.f32 %v1089, %v1113
    %1116 = vst [vmem:[#allocation1] ss:$2 sm:$0xff] %v1060
    %v1117 = vld.sshfl [vmem:[#allocation1] sm:$0xff pattern:$0x75316420]
    %v1118 = vld.sshfl [vmem:[#allocation1 + $0x8] sm:$0xff pattern:$0x75316420]
    %1121 = vrot.lane.b32.xlu0 %v1117, 15
    %v1122 = vpop.permute.xlu0 %1121
    %1123 = vrot.lane.b32.xlu0 %v1118, 15
    %v1124 = vpop.permute.xlu0 %1123
    %v1125 = vsel %vm140, %v1122, %v1124
    %v1126 = vsel %vm140, %v1124, %v1122
    %v1127 = vld [vmem:[%s143] sm:$0xff]
    %1129 = vst [vmem:[#allocation1] ss:$2 sm:$0xff] %v1127
    %v1130 = vld.sshfl [vmem:[#allocation1] sm:$0xff pattern:$0x75316420]
    %v1131 = vld.sshfl [vmem:[#allocation1 + $0x8] sm:$0xff pattern:$0x75316420]
    %v1134 = vmul.f32 %v1126, %v1130
    %v1135 = vmul.f32 %v1125, %v1131
    %v1138 = vrot.slane %v1135, 4
    %v1139 = vsel %vm99, %v1134, %v1138
    %v1141 = vadd.f32 %v1115, %v1139
    %1142 = vst [vmem:[#allocation1] ss:$2 sm:$0xff] %v1060
    %v1143 = vld.sshfl [vmem:[#allocation1] sm:$0xff pattern:$0x75316420]
    %v1144 = vld.sshfl [vmem:[#allocation1 + $0x8] sm:$0xff pattern:$0x75316420]
    %1147 = vrot.lane.b32.xlu0 %v1143, 1
    %v1148 = vpop.permute.xlu0 %1147
    %1149 = vrot.lane.b32.xlu0 %v1144, 1
    %v1150 = vpop.permute.xlu0 %1149
    %v1151 = vsel %vm168, %v1148, %v1150
    %v1152 = vsel %vm168, %v1150, %v1148
    %v1153 = vld [vmem:[%s171] sm:$0xff]
    %1155 = vst [vmem:[#allocation1] ss:$2 sm:$0xff] %v1153
    %v1156 = vld.sshfl [vmem:[#allocation1] sm:$0xff pattern:$0x75316420]
    %v1157 = vld.sshfl [vmem:[#allocation1 + $0x8] sm:$0xff pattern:$0x75316420]
    %v1160 = vmul.f32 %v1152, %v1156
    %v1161 = vmul.f32 %v1151, %v1157
    %v1164 = vrot.slane %v1161, 4
    %v1165 = vsel %vm99, %v1160, %v1164
    %v1167 = vadd.f32 %v1141, %v1165
    %1168 = vst [vmem:[#allocation1] ss:$2 sm:$0xff] %v1060
    %v1169 = vld.sshfl [vmem:[#allocation1] sm:$0xff pattern:$0x75316420]
    %v1170 = vld.sshfl [vmem:[#allocation1 + $0x8] sm:$0xff pattern:$0x75316420]
    %1173 = vrot.lane.b32.xlu0 %v1169, 127
    %v1174 = vpop.permute.xlu0 %1173
    %1175 = vrot.lane.b32.xlu0 %v1170, 127
    %v1176 = vpop.permute.xlu0 %1175
    %v1177 = vsel %vm196, %v1174, %v1176
    %v1178 = vsel %vm196, %v1176, %v1174
    %v1179 = vld [vmem:[%s199] sm:$0xff]
    %1181 = vst [vmem:[#allocation1] ss:$2 sm:$0xff] %v1179
    %v1182 = vld.sshfl [vmem:[#allocation1] sm:$0xff pattern:$0x75316420]
    %v1183 = vld.sshfl [vmem:[#allocation1 + $0x8] sm:$0xff pattern:$0x75316420]
    %v1186 = vmul.f32 %v1177, %v1182
    %v1187 = vmul.f32 %v1178, %v1183
    %v1190 = vrot.slane %v1187, 4
    %v1191 = vsel %vm99, %v1186, %v1190
    %v1193 = vadd.f32 %v1167, %v1191
    %1194 = vst [vmem:[#allocation1] ss:$2 sm:$0xff] %v1060
    %v1195 = vld.sshfl [vmem:[#allocation1] sm:$0xff pattern:$0x75316420]
    %v1196 = vld.sshfl [vmem:[#allocation1 + $0x8] sm:$0xff pattern:$0x75316420]
    %1199 = vrot.lane.b32.xlu0 %v1195, 113
    %v1200 = vpop.permute.xlu0 %1199
    %1201 = vrot.lane.b32.xlu0 %v1196, 113
    %v1202 = vpop.permute.xlu0 %1201
    %v1203 = vsel %vm224, %v1200, %v1202
    %v1204 = vsel %vm224, %v1202, %v1200
    %v1205 = vld [vmem:[%s227] sm:$0xff]
    %1207 = vst [vmem:[#allocation1] ss:$2 sm:$0xff] %v1205
    %v1208 = vld.sshfl [vmem:[#allocation1] sm:$0xff pattern:$0x75316420]
    %v1209 = vld.sshfl [vmem:[#allocation1 + $0x8] sm:$0xff pattern:$0x75316420]
    %v1212 = vmul.f32 %v1203, %v1208
    %v1213 = vmul.f32 %v1204, %v1209
    %v1216 = vrot.slane %v1213, 4
    %v1217 = vsel %vm99, %v1212, %v1216
    %v1219 = vadd.f32 %v1193, %v1217
    %1220 = vst [vmem:[#allocation1] ss:$2 sm:$0xff] %v1060
    %v1221 = vld.sshfl [vmem:[#allocation1] sm:$0xff pattern:$0x75316420]
    %v1222 = vld.sshfl [vmem:[#allocation1 + $0x8] sm:$0xff pattern:$0x75316420]
    %1225 = vrot.lane.b32.xlu0 %v1221, 112
    %v1226 = vpop.permute.xlu0 %1225
    %1227 = vrot.lane.b32.xlu0 %v1222, 112
    %v1228 = vpop.permute.xlu0 %1227
    %v1229 = vsel %vm252, %v1226, %v1228
    %v1230 = vsel %vm252, %v1228, %v1226
    %v1231 = vld [vmem:[%s255] sm:$0xff]
    %1233 = vst [vmem:[#allocation1] ss:$2 sm:$0xff] %v1231
    %v1234 = vld.sshfl [vmem:[#allocation1] sm:$0xff pattern:$0x75316420]
    %v1235 = vld.sshfl [vmem:[#allocation1 + $0x8] sm:$0xff pattern:$0x75316420]
    %v1238 = vmul.f32 %v1229, %v1234
    %v1239 = vmul.f32 %v1230, %v1235
    %v1242 = vrot.slane %v1239, 4
    %v1243 = vsel %vm99, %v1238, %v1242
    %v1245 = vadd.f32 %v1219, %v1243
    %1246 = vst [vmem:[#allocation1] ss:$2 sm:$0xff] %v1060
    %v1247 = vld.sshfl [vmem:[#allocation1] sm:$0xff pattern:$0x75316420]
    %v1248 = vld.sshfl [vmem:[#allocation1 + $0x8] sm:$0xff pattern:$0x75316420]
    %1251 = vrot.lane.b32.xlu0 %v1247, 111
    %v1252 = vpop.permute.xlu0 %1251
    %1253 = vrot.lane.b32.xlu0 %v1248, 111
    %v1254 = vpop.permute.xlu0 %1253
    %v1255 = vsel %vm280, %v1252, %v1254
    %v1256 = vsel %vm280, %v1254, %v1252
    %v1257 = vld [vmem:[%s283] sm:$0xff]
    %1259 = vst [vmem:[#allocation1] ss:$2 sm:$0xff] %v1257
    %v1260 = vld.sshfl [vmem:[#allocation1] sm:$0xff pattern:$0x75316420]
    %v1261 = vld.sshfl [vmem:[#allocation1 + $0x8] sm:$0xff pattern:$0x75316420]
    %v1264 = vmul.f32 %v1255, %v1260
    %v1265 = vmul.f32 %v1256, %v1261
    %v1268 = vrot.slane %v1265, 4
    %v1269 = vsel %vm99, %v1264, %v1268
    %v1271 = vadd.f32 %v1245, %v1269
    %v1272 = vld [vmem:[%s5] sm:$0xff]
    %v1273 = vld [vmem:[%s5 + $0x8] sm:$0xff]
    %1275 = vset.pattern.permute.xlu0 12
    %1276 = vperm.xlu0 %1275, %v1272
    %v1277 = vpop.permute.xlu0 %1276
    %1280 = vset.pattern.permute.xlu0 12
    %1281 = vperm.xlu0 %1280, %v1273
    %v1282 = vpop.permute.xlu0 %1281
    %1285 = vst [vmem:[#allocation1] ss:$2 sm:$0xff] %v1271
    %v1286 = vld.sshfl [vmem:[#allocation1] sm:$0xff pattern:$0x75316420]
    %v1287 = vld.sshfl [vmem:[#allocation1 + $0x8] sm:$0xff pattern:$0x75316420]
    %v1288 = vsel %vm315, %v1272, 0
    %v1290 = vsel %vm315, %v1273, 0
    %v1292 = vsel %vm99, %v1286, 0
    %v1294 = vsel %vm99, %v1287, 0
    %1296 = vmatpush.msra.mxu0 0.0
    %1297 = vmatpush.msra.mxu0 0.0
    %1298 = vmatpush.msra.mxu0 0.0
    %1299 = vmatpush.msra.mxu0 0.0
    %1300 = vmatpush.msra.mxu0 0.0
    %1301 = vmatpush.msra.mxu0 0.0
    %1302 = vmatpush.msra.mxu0 0.0
    %1303 = vmatpush.msra.mxu0 0.0
    %1304 = vmatpush.msra.mxu0 0.0
    %1305 = vmatpush.msra.mxu0 0.0
    %1306 = vmatpush.msra.mxu0 0.0
    %1307 = vmatpush.msra.mxu0 0.0
    %1308 = vmatpush.msra.mxu0 0.0
    %1309 = vmatpush.msra.mxu0 0.0
    %1310 = vmatpush.msra.mxu0 0.0
    %1311 = vmatpush.msra.mxu0 %v1292
    %1312 = vmatmul.f32.gmra.mxu0 %v1288
    %v1313 = vpop.f32.mrf.mxu0
    %v1314 = vadd.f32 %v1277, %v1313
    %1315 = vmatmul.f32.gmra.mxu0 %v1290
    %v1316 = vpop.f32.mrf.mxu0
    %v1317 = vadd.f32 %v1282, %v1316
    %1318 = vdwg.mxu0
    %1319 = vmatpush.msra.mxu0 0.0
    %1320 = vmatpush.msra.mxu0 0.0
    %1321 = vmatpush.msra.mxu0 0.0
    %1322 = vmatpush.msra.mxu0 0.0
    %1323 = vmatpush.msra.mxu0 0.0
    %1324 = vmatpush.msra.mxu0 0.0
    %1325 = vmatpush.msra.mxu0 0.0
    %1326 = vmatpush.msra.mxu0 0.0
    %1327 = vmatpush.msra.mxu0 0.0
    %1328 = vmatpush.msra.mxu0 0.0
    %1329 = vmatpush.msra.mxu0 0.0
    %1330 = vmatpush.msra.mxu0 0.0
    %1331 = vmatpush.msra.mxu0 0.0
    %1332 = vmatpush.msra.mxu0 0.0
    %1333 = vmatpush.msra.mxu0 0.0
    %1334 = vmatpush.msra.mxu0 %v1294
    %1335 = vmatmul.f32.gmra.mxu0 %v1288
    %v1336 = vpop.f32.mrf.mxu0
    %v1337 = vadd.f32 %v1277, %v1336
    %1338 = vmatmul.f32.gmra.mxu0 %v1290
    %v1339 = vpop.f32.mrf.mxu0
    %v1340 = vadd.f32 %v1282, %v1339
    %1341 = vdwg.mxu0
    %vm1342 = vcmp.ge.f32.partialorder %v1314, 0.0
    %vm1343 = vcmp.ge.f32.partialorder %v1337, 0.0
    %vm1344 = vcmp.ge.f32.partialorder %v1317, 0.0
    %vm1345 = vcmp.ge.f32.partialorder %v1340, 0.0
    %s1346 = sld [smem:[#allocation2]]
    %v1347 = vstv %s1346
    %v1348 = vmul.f32 %v1347, %v1314
    %v1349 = vmul.f32 %v1347, %v1337
    %v1350 = vmul.f32 %v1347, %v1317
    %v1351 = vmul.f32 %v1347, %v1340
    %v1352 = vsel %vm1342, %v1314, %v1348
    %v1353 = vsel %vm1343, %v1337, %v1349
    %v1354 = vsel %vm1344, %v1317, %v1350
    %v1355 = vsel %vm1345, %v1340, %v1351
    %v1356 = vld [vmem:[%s384] sm:$0xff]
    %v1357 = vld [vmem:[%s384 + $0x8] sm:$0xff]
    %v1358 = vld [vmem:[%s384 + $0x10] sm:$0xf]
    %v1359 = vld [vmem:[%s384 + $0x18] sm:$0xf]
    %v1360 = vmul.f32 %v1352, %v1356
    %v1361 = vmul.f32 %v1353, %v1357
    %v1362 = vmul.f32 %v1354, %v1358
    %v1363 = vmul.f32 %v1355, %v1359
    %1364 = vrot.lane.b32.xlu0 %v1352, 17
    %v1365 = vpop.permute.xlu0 %1364
    %1366 = vrot.lane.b32.xlu0 %v1354, 17
    %v1367 = vpop.permute.xlu0 %1366
    %1368 = vrot.lane.b32.xlu0 %v1353, 17
    %v1369 = vpop.permute.xlu0 %1368
    %1370 = vrot.lane.b32.xlu0 %v1355, 17
    %v1371 = vpop.permute.xlu0 %1370
    %v1372 = vsel %vm84, %v1365, %v1369
    %v1373 = vsel %vm84, %v1367, %v1371
    %v1374 = vsel %vm84, %v1369, %v1365
    %v1375 = vsel %vm84, %v1371, %v1367
    %v1376 = vld [vmem:[%s3] sm:$0xff]
    %v1377 = vld [vmem:[%s3 + $0x8] sm:$0xff]
    %v1378 = vld [vmem:[%s3 + $0x10] sm:$0xf]
    %v1379 = vld [vmem:[%s3 + $0x18] sm:$0xf]
    %v1380 = vmul.f32 %v1374, %v1376
    %v1381 = vmul.f32 %v1372, %v1377
    %v1382 = vmul.f32 %v1375, %v1378
    %v1383 = vmul.f32 %v1373, %v1379
    %v1384 = vadd.f32 %v1360, %v1380
    %v1385 = vadd.f32 %v1361, %v1381
    %v1386 = vadd.f32 %v1362, %v1382
    %v1387 = vadd.f32 %v1363, %v1383
    %1388 = vrot.lane.b32.xlu0 %v1352, 16
    %v1389 = vpop.permute.xlu0 %1388
    %1390 = vrot.lane.b32.xlu0 %v1354, 16
    %v1391 = vpop.permute.xlu0 %1390
    %1392 = vrot.lane.b32.xlu0 %v1353, 16
    %v1393 = vpop.permute.xlu0 %1392
    %1394 = vrot.lane.b32.xlu0 %v1355, 16
    %v1395 = vpop.permute.xlu0 %1394
    %v1396 = vsel %vm112, %v1389, %v1393
    %v1397 = vsel %vm112, %v1391, %v1395
    %v1398 = vsel %vm112, %v1393, %v1389
    %v1399 = vsel %vm112, %v1395, %v1391
    %v1400 = vld [vmem:[%s429] sm:$0xff]
    %v1401 = vld [vmem:[%s429 + $0x8] sm:$0xff]
    %v1402 = vld [vmem:[%s429 + $0x10] sm:$0xf]
    %v1403 = vld [vmem:[%s429 + $0x18] sm:$0xf]
    %v1404 = vmul.f32 %v1398, %v1400
    %v1405 = vmul.f32 %v1396, %v1401
    %v1406 = vmul.f32 %v1399, %v1402
    %v1407 = vmul.f32 %v1397, %v1403
    %v1408 = vadd.f32 %v1384, %v1404
    %v1409 = vadd.f32 %v1385, %v1405
    %v1410 = vadd.f32 %v1386, %v1406
    %v1411 = vadd.f32 %v1387, %v1407
    %1412 = vrot.lane.b32.xlu0 %v1352, 15
    %v1413 = vpop.permute.xlu0 %1412
    %1414 = vrot.lane.b32.xlu0 %v1354, 15
    %v1415 = vpop.permute.xlu0 %1414
    %1416 = vrot.lane.b32.xlu0 %v1353, 15
    %v1417 = vpop.permute.xlu0 %1416
    %1418 = vrot.lane.b32.xlu0 %v1355, 15
    %v1419 = vpop.permute.xlu0 %1418
    %v1420 = vsel %vm140, %v1413, %v1417
    %v1421 = vsel %vm140, %v1415, %v1419
    %v1422 = vsel %vm140, %v1417, %v1413
    %v1423 = vsel %vm140, %v1419, %v1415
    %v1424 = vld [vmem:[%s454] sm:$0xff]
    %v1425 = vld [vmem:[%s454 + $0x8] sm:$0xff]
    %v1426 = vld [vmem:[%s454 + $0x10] sm:$0xf]
    %v1427 = vld [vmem:[%s454 + $0x18] sm:$0xf]
    %v1428 = vmul.f32 %v1422, %v1424
    %v1429 = vmul.f32 %v1420, %v1425
    %v1430 = vmul.f32 %v1423, %v1426
    %v1431 = vmul.f32 %v1421, %v1427
    %v1432 = vadd.f32 %v1408, %v1428
    %v1433 = vadd.f32 %v1409, %v1429
    %v1434 = vadd.f32 %v1410, %v1430
    %v1435 = vadd.f32 %v1411, %v1431
    %1436 = vrot.lane.b32.xlu0 %v1352, 1
    %v1437 = vpop.permute.xlu0 %1436
    %1438 = vrot.lane.b32.xlu0 %v1354, 1
    %v1439 = vpop.permute.xlu0 %1438
    %1440 = vrot.lane.b32.xlu0 %v1353, 1
    %v1441 = vpop.permute.xlu0 %1440
    %1442 = vrot.lane.b32.xlu0 %v1355, 1
    %v1443 = vpop.permute.xlu0 %1442
    %v1444 = vsel %vm168, %v1437, %v1441
    %v1445 = vsel %vm168, %v1439, %v1443
    %v1446 = vsel %vm168, %v1441, %v1437
    %v1447 = vsel %vm168, %v1443, %v1439
    %v1448 = vld [vmem:[%s479] sm:$0xff]
    %v1449 = vld [vmem:[%s479 + $0x8] sm:$0xff]
    %v1450 = vld [vmem:[%s479 + $0x10] sm:$0xf]
    %v1451 = vld [vmem:[%s479 + $0x18] sm:$0xf]
    %v1452 = vmul.f32 %v1446, %v1448
    %v1453 = vmul.f32 %v1444, %v1449
    %v1454 = vmul.f32 %v1447, %v1450
    %v1455 = vmul.f32 %v1445, %v1451
    %v1456 = vadd.f32 %v1432, %v1452
    %v1457 = vadd.f32 %v1433, %v1453
    %v1458 = vadd.f32 %v1434, %v1454
    %v1459 = vadd.f32 %v1435, %v1455
    %1460 = vrot.lane.b32.xlu0 %v1352, 127
    %v1461 = vpop.permute.xlu0 %1460
    %1462 = vrot.lane.b32.xlu0 %v1354, 127
    %v1463 = vpop.permute.xlu0 %1462
    %1464 = vrot.lane.b32.xlu0 %v1353, 127
    %v1465 = vpop.permute.xlu0 %1464
    %1466 = vrot.lane.b32.xlu0 %v1355, 127
    %v1467 = vpop.permute.xlu0 %1466
    %v1468 = vsel %vm196, %v1461, %v1465
    %v1469 = vsel %vm196, %v1463, %v1467
    %v1470 = vsel %vm196, %v1465, %v1461
    %v1471 = vsel %vm196, %v1467, %v1463
    %v1472 = vld [vmem:[%s504] sm:$0xff]
    %v1473 = vld [vmem:[%s504 + $0x8] sm:$0xff]
    %v1474 = vld [vmem:[%s504 + $0x10] sm:$0xf]
    %v1475 = vld [vmem:[%s504 + $0x18] sm:$0xf]
    %v1476 = vmul.f32 %v1468, %v1472
    %v1477 = vmul.f32 %v1470, %v1473
    %v1478 = vmul.f32 %v1469, %v1474
    %v1479 = vmul.f32 %v1471, %v1475
    %v1480 = vadd.f32 %v1456, %v1476
    %v1481 = vadd.f32 %v1457, %v1477
    %v1482 = vadd.f32 %v1458, %v1478
    %v1483 = vadd.f32 %v1459, %v1479
    %1484 = vrot.lane.b32.xlu0 %v1352, 113
    %v1485 = vpop.permute.xlu0 %1484
    %1486 = vrot.lane.b32.xlu0 %v1354, 113
    %v1487 = vpop.permute.xlu0 %1486
    %1488 = vrot.lane.b32.xlu0 %v1353, 113
    %v1489 = vpop.permute.xlu0 %1488
    %1490 = vrot.lane.b32.xlu0 %v1355, 113
    %v1491 = vpop.permute.xlu0 %1490
    %v1492 = vsel %vm224, %v1485, %v1489
    %v1493 = vsel %vm224, %v1487, %v1491
    %v1494 = vsel %vm224, %v1489, %v1485
    %v1495 = vsel %vm224, %v1491, %v1487
    %v1496 = vld [vmem:[%s529] sm:$0xff]
    %v1497 = vld [vmem:[%s529 + $0x8] sm:$0xff]
    %v1498 = vld [vmem:[%s529 + $0x10] sm:$0xf]
    %v1499 = vld [vmem:[%s529 + $0x18] sm:$0xf]
    %v1500 = vmul.f32 %v1492, %v1496
    %v1501 = vmul.f32 %v1494, %v1497
    %v1502 = vmul.f32 %v1493, %v1498
    %v1503 = vmul.f32 %v1495, %v1499
    %v1504 = vadd.f32 %v1480, %v1500
    %v1505 = vadd.f32 %v1481, %v1501
    %v1506 = vadd.f32 %v1482, %v1502
    %v1507 = vadd.f32 %v1483, %v1503
    %1508 = vrot.lane.b32.xlu0 %v1352, 112
    %v1509 = vpop.permute.xlu0 %1508
    %1510 = vrot.lane.b32.xlu0 %v1354, 112
    %v1511 = vpop.permute.xlu0 %1510
    %1512 = vrot.lane.b32.xlu0 %v1353, 112
    %v1513 = vpop.permute.xlu0 %1512
    %1514 = vrot.lane.b32.xlu0 %v1355, 112
    %v1515 = vpop.permute.xlu0 %1514
    %v1516 = vsel %vm252, %v1509, %v1513
    %v1517 = vsel %vm252, %v1511, %v1515
    %v1518 = vsel %vm252, %v1513, %v1509
    %v1519 = vsel %vm252, %v1515, %v1511
    %v1520 = vld [vmem:[%s554] sm:$0xff]
    %v1521 = vld [vmem:[%s554 + $0x8] sm:$0xff]
    %v1522 = vld [vmem:[%s554 + $0x10] sm:$0xf]
    %v1523 = vld [vmem:[%s554 + $0x18] sm:$0xf]
    %v1524 = vmul.f32 %v1516, %v1520
    %v1525 = vmul.f32 %v1518, %v1521
    %v1526 = vmul.f32 %v1517, %v1522
    %v1527 = vmul.f32 %v1519, %v1523
    %v1528 = vadd.f32 %v1504, %v1524
    %v1529 = vadd.f32 %v1505, %v1525
    %v1530 = vadd.f32 %v1506, %v1526
    %v1531 = vadd.f32 %v1507, %v1527
    %1532 = vrot.lane.b32.xlu0 %v1352, 111
    %v1533 = vpop.permute.xlu0 %1532
    %1534 = vrot.lane.b32.xlu0 %v1354, 111
    %v1535 = vpop.permute.xlu0 %1534
    %1536 = vrot.lane.b32.xlu0 %v1353, 111
    %v1537 = vpop.permute.xlu0 %1536
    %1538 = vrot.lane.b32.xlu0 %v1355, 111
    %v1539 = vpop.permute.xlu0 %1538
    %v1540 = vsel %vm280, %v1533, %v1537
    %v1541 = vsel %vm280, %v1535, %v1539
    %v1542 = vsel %vm280, %v1537, %v1533
    %v1543 = vsel %vm280, %v1539, %v1535
    %v1544 = vld [vmem:[%s579] sm:$0xff]
    %v1545 = vld [vmem:[%s579 + $0x8] sm:$0xff]
    %v1546 = vld [vmem:[%s579 + $0x10] sm:$0xf]
    %v1547 = vld [vmem:[%s579 + $0x18] sm:$0xf]
    %v1548 = vmul.f32 %v1540, %v1544
    %v1549 = vmul.f32 %v1542, %v1545
    %v1550 = vmul.f32 %v1541, %v1546
    %v1551 = vmul.f32 %v1543, %v1547
    %v1552 = vadd.f32 %v1528, %v1548
    %v1553 = vadd.f32 %v1529, %v1549
    %v1554 = vadd.f32 %v1530, %v1550
    %v1555 = vadd.f32 %v1531, %v1551
    %v1556 = vld [vmem:[%s592] sm:$0xff]
    %v1557 = vld [vmem:[%s592 + $0x8] sm:$0xff]
    %1559 = vset.pattern.permute.xlu0 12
    %1560 = vperm.xlu0 %1559, %v1556
    %v1561 = vpop.permute.xlu0 %1560
    %1564 = vset.pattern.permute.xlu0 12
    %1565 = vperm.xlu0 %1564, %v1557
    %v1566 = vpop.permute.xlu0 %1565
    %v1568 = vsel %vm605, %v1556, 0
    %v1570 = vsel %vm605, %v1557, 0
    %v1573 = vsel %vm99, %v1554, 0
    %v1576 = vsel %vm99, %v1555, 0
    %1578 = vmatpush.msra.mxu0 0.0
    %1579 = vmatpush.msra.mxu0 0.0
    %1580 = vmatpush.msra.mxu0 0.0
    %1581 = vmatpush.msra.mxu0 0.0
    %1582 = vmatpush.msra.mxu0 0.0
    %1583 = vmatpush.msra.mxu0 0.0
    %1584 = vmatpush.msra.mxu0 0.0
    %1585 = vmatpush.msra.mxu0 0.0
    %1586 = vmatpush.msra.mxu0 0.0
    %1587 = vmatpush.msra.mxu0 0.0
    %1588 = vmatpush.msra.mxu0 0.0
    %1589 = vmatpush.msra.mxu0 0.0
    %1590 = vmatpush.msra.mxu0 0.0
    %1591 = vmatpush.msra.mxu0 0.0
    %1592 = vmatpush.msra.mxu0 %v1573
    %1593 = vmatpush.msra.mxu0 %v1552
    %1594 = vmatmul.f32.gmra.mxu0 %v1568
    %v1595 = vpop.f32.mrf.mxu0
    %v1596 = vadd.f32 %v1561, %v1595
    %1597 = vmatmul.f32.gmra.mxu0 %v1570
    %v1598 = vpop.f32.mrf.mxu0
    %v1599 = vadd.f32 %v1566, %v1598
    %1600 = vdwg.mxu0
    %1601 = vmatpush.msra.mxu0 0.0
    %1602 = vmatpush.msra.mxu0 0.0
    %1603 = vmatpush.msra.mxu0 0.0
    %1604 = vmatpush.msra.mxu0 0.0
    %1605 = vmatpush.msra.mxu0 0.0
    %1606 = vmatpush.msra.mxu0 0.0
    %1607 = vmatpush.msra.mxu0 0.0
    %1608 = vmatpush.msra.mxu0 0.0
    %1609 = vmatpush.msra.mxu0 0.0
    %1610 = vmatpush.msra.mxu0 0.0
    %1611 = vmatpush.msra.mxu0 0.0
    %1612 = vmatpush.msra.mxu0 0.0
    %1613 = vmatpush.msra.mxu0 0.0
    %1614 = vmatpush.msra.mxu0 0.0
    %1615 = vmatpush.msra.mxu0 %v1576
    %1616 = vmatpush.msra.mxu0 %v1553
    %1617 = vmatmul.f32.gmra.mxu0 %v1568
    %v1618 = vpop.f32.mrf.mxu0
    %v1619 = vadd.f32 %v1561, %v1618
    %1620 = vmatmul.f32.gmra.mxu0 %v1570
    %v1621 = vpop.f32.mrf.mxu0
    %v1622 = vadd.f32 %v1566, %v1621
    %1623 = vdwg.mxu0
    %vm1624 = vcmp.ge.f32.partialorder %v1596, 0.0
    %vm1625 = vcmp.ge.f32.partialorder %v1619, 0.0
    %vm1626 = vcmp.ge.f32.partialorder %v1599, 0.0
    %vm1627 = vcmp.ge.f32.partialorder %v1622, 0.0
    %s1628 = sld [smem:[#allocation2 + $0x1]]
    %v1629 = vstv %s1628
    %v1630 = vmul.f32 %v1629, %v1596
    %v1631 = vmul.f32 %v1629, %v1619
    %v1632 = vmul.f32 %v1629, %v1599
    %v1633 = vmul.f32 %v1629, %v1622
    %v1634 = vsel %vm1624, %v1596, %v1630
    %v1635 = vsel %vm1625, %v1619, %v1631
    %v1636 = vsel %vm1626, %v1599, %v1632
    %v1637 = vsel %vm1627, %v1622, %v1633
    %v1638 = vld [vmem:[%s676] sm:$0xff]
    %v1639 = vld [vmem:[%s676 + $0x8] sm:$0xff]
    %v1640 = vld [vmem:[%s676 + $0x10] sm:$0xf]
    %v1641 = vld [vmem:[%s676 + $0x18] sm:$0xf]
    %v1642 = vmul.f32 %v1634, %v1638
    %v1643 = vmul.f32 %v1635, %v1639
    %v1644 = vmul.f32 %v1636, %v1640
    %v1645 = vmul.f32 %v1637, %v1641
    %1646 = vrot.lane.b32.xlu0 %v1634, 17
    %v1647 = vpop.permute.xlu0 %1646
    %1648 = vrot.lane.b32.xlu0 %v1636, 17
    %v1649 = vpop.permute.xlu0 %1648
    %1650 = vrot.lane.b32.xlu0 %v1635, 17
    %v1651 = vpop.permute.xlu0 %1650
    %1652 = vrot.lane.b32.xlu0 %v1637, 17
    %v1653 = vpop.permute.xlu0 %1652
    %v1654 = vsel %vm84, %v1647, %v1651
    %v1655 = vsel %vm84, %v1649, %v1653
    %v1656 = vsel %vm84, %v1651, %v1647
    %v1657 = vsel %vm84, %v1653, %v1649
    %v1658 = vld [vmem:[#allocation6] sm:$0xff]
    %v1659 = vld [vmem:[#allocation6 + $0x8] sm:$0xff]
    %v1660 = vld [vmem:[#allocation6 + $0x10] sm:$0xf]
    %v1661 = vld [vmem:[#allocation6 + $0x18] sm:$0xf]
    %v1662 = vmul.f32 %v1656, %v1658
    %v1663 = vmul.f32 %v1654, %v1659
    %v1664 = vmul.f32 %v1657, %v1660
    %v1665 = vmul.f32 %v1655, %v1661
    %v1666 = vadd.f32 %v1642, %v1662
    %v1667 = vadd.f32 %v1643, %v1663
    %v1668 = vadd.f32 %v1644, %v1664
    %v1669 = vadd.f32 %v1645, %v1665
    %1670 = vrot.lane.b32.xlu0 %v1634, 16
    %v1671 = vpop.permute.xlu0 %1670
    %1672 = vrot.lane.b32.xlu0 %v1636, 16
    %v1673 = vpop.permute.xlu0 %1672
    %1674 = vrot.lane.b32.xlu0 %v1635, 16
    %v1675 = vpop.permute.xlu0 %1674
    %1676 = vrot.lane.b32.xlu0 %v1637, 16
    %v1677 = vpop.permute.xlu0 %1676
    %v1678 = vsel %vm112, %v1671, %v1675
    %v1679 = vsel %vm112, %v1673, %v1677
    %v1680 = vsel %vm112, %v1675, %v1671
    %v1681 = vsel %vm112, %v1677, %v1673
    %v1682 = vld [vmem:[%s721] sm:$0xff]
    %v1683 = vld [vmem:[%s721 + $0x8] sm:$0xff]
    %v1684 = vld [vmem:[%s721 + $0x10] sm:$0xf]
    %v1685 = vld [vmem:[%s721 + $0x18] sm:$0xf]
    %v1686 = vmul.f32 %v1680, %v1682
    %v1687 = vmul.f32 %v1678, %v1683
    %v1688 = vmul.f32 %v1681, %v1684
    %v1689 = vmul.f32 %v1679, %v1685
    %v1690 = vadd.f32 %v1666, %v1686
    %v1691 = vadd.f32 %v1667, %v1687
    %v1692 = vadd.f32 %v1668, %v1688
    %v1693 = vadd.f32 %v1669, %v1689
    %1694 = vrot.lane.b32.xlu0 %v1634, 15
    %v1695 = vpop.permute.xlu0 %1694
    %1696 = vrot.lane.b32.xlu0 %v1636, 15
    %v1697 = vpop.permute.xlu0 %1696
    %1698 = vrot.lane.b32.xlu0 %v1635, 15
    %v1699 = vpop.permute.xlu0 %1698
    %1700 = vrot.lane.b32.xlu0 %v1637, 15
    %v1701 = vpop.permute.xlu0 %1700
    %v1702 = vsel %vm140, %v1695, %v1699
    %v1703 = vsel %vm140, %v1697, %v1701
    %v1704 = vsel %vm140, %v1699, %v1695
    %v1705 = vsel %vm140, %v1701, %v1697
    %v1706 = vld [vmem:[%s746] sm:$0xff]
    %v1707 = vld [vmem:[%s746 + $0x8] sm:$0xff]
    %v1708 = vld [vmem:[%s746 + $0x10] sm:$0xf]
    %v1709 = vld [vmem:[%s746 + $0x18] sm:$0xf]
    %v1710 = vmul.f32 %v1704, %v1706
    %v1711 = vmul.f32 %v1702, %v1707
    %v1712 = vmul.f32 %v1705, %v1708
    %v1713 = vmul.f32 %v1703, %v1709
    %v1714 = vadd.f32 %v1690, %v1710
    %v1715 = vadd.f32 %v1691, %v1711
    %v1716 = vadd.f32 %v1692, %v1712
    %v1717 = vadd.f32 %v1693, %v1713
    %1718 = vrot.lane.b32.xlu0 %v1634, 1
    %v1719 = vpop.permute.xlu0 %1718
    %1720 = vrot.lane.b32.xlu0 %v1636, 1
    %v1721 = vpop.permute.xlu0 %1720
    %1722 = vrot.lane.b32.xlu0 %v1635, 1
    %v1723 = vpop.permute.xlu0 %1722
    %1724 = vrot.lane.b32.xlu0 %v1637, 1
    %v1725 = vpop.permute.xlu0 %1724
    %v1726 = vsel %vm168, %v1719, %v1723
    %v1727 = vsel %vm168, %v1721, %v1725
    %v1728 = vsel %vm168, %v1723, %v1719
    %v1729 = vsel %vm168, %v1725, %v1721
    %v1730 = vld [vmem:[%s771] sm:$0xff]
    %v1731 = vld [vmem:[%s771 + $0x8] sm:$0xff]
    %v1732 = vld [vmem:[%s771 + $0x10] sm:$0xf]
    %v1733 = vld [vmem:[%s771 + $0x18] sm:$0xf]
    %v1734 = vmul.f32 %v1728, %v1730
    %v1735 = vmul.f32 %v1726, %v1731
    %v1736 = vmul.f32 %v1729, %v1732
    %v1737 = vmul.f32 %v1727, %v1733
    %v1738 = vadd.f32 %v1714, %v1734
    %v1739 = vadd.f32 %v1715, %v1735
    %v1740 = vadd.f32 %v1716, %v1736
    %v1741 = vadd.f32 %v1717, %v1737
    %1742 = vrot.lane.b32.xlu0 %v1634, 127
    %v1743 = vpop.permute.xlu0 %1742
    %1744 = vrot.lane.b32.xlu0 %v1636, 127
    %v1745 = vpop.permute.xlu0 %1744
    %1746 = vrot.lane.b32.xlu0 %v1635, 127
    %v1747 = vpop.permute.xlu0 %1746
    %1748 = vrot.lane.b32.xlu0 %v1637, 127
    %v1749 = vpop.permute.xlu0 %1748
    %v1750 = vsel %vm196, %v1743, %v1747
    %v1751 = vsel %vm196, %v1745, %v1749
    %v1752 = vsel %vm196, %v1747, %v1743
    %v1753 = vsel %vm196, %v1749, %v1745
    %v1754 = vld [vmem:[%s796] sm:$0xff]
    %v1755 = vld [vmem:[%s796 + $0x8] sm:$0xff]
    %v1756 = vld [vmem:[%s796 + $0x10] sm:$0xf]
    %v1757 = vld [vmem:[%s796 + $0x18] sm:$0xf]
    %v1758 = vmul.f32 %v1750, %v1754
    %v1759 = vmul.f32 %v1752, %v1755
    %v1760 = vmul.f32 %v1751, %v1756
    %v1761 = vmul.f32 %v1753, %v1757
    %v1762 = vadd.f32 %v1738, %v1758
    %v1763 = vadd.f32 %v1739, %v1759
    %v1764 = vadd.f32 %v1740, %v1760
    %v1765 = vadd.f32 %v1741, %v1761
    %1766 = vrot.lane.b32.xlu0 %v1634, 113
    %v1767 = vpop.permute.xlu0 %1766
    %1768 = vrot.lane.b32.xlu0 %v1636, 113
    %v1769 = vpop.permute.xlu0 %1768
    %1770 = vrot.lane.b32.xlu0 %v1635, 113
    %v1771 = vpop.permute.xlu0 %1770
    %1772 = vrot.lane.b32.xlu0 %v1637, 113
    %v1773 = vpop.permute.xlu0 %1772
    %v1774 = vsel %vm224, %v1767, %v1771
    %v1775 = vsel %vm224, %v1769, %v1773
    %v1776 = vsel %vm224, %v1771, %v1767
    %v1777 = vsel %vm224, %v1773, %v1769
    %v1778 = vld [vmem:[%s821] sm:$0xff]
    %v1779 = vld [vmem:[%s821 + $0x8] sm:$0xff]
    %v1780 = vld [vmem:[%s821 + $0x10] sm:$0xf]
    %v1781 = vld [vmem:[%s821 + $0x18] sm:$0xf]
    %v1782 = vmul.f32 %v1774, %v1778
    %v1783 = vmul.f32 %v1776, %v1779
    %v1784 = vmul.f32 %v1775, %v1780
    %v1785 = vmul.f32 %v1777, %v1781
    %v1786 = vadd.f32 %v1762, %v1782
    %v1787 = vadd.f32 %v1763, %v1783
    %v1788 = vadd.f32 %v1764, %v1784
    %v1789 = vadd.f32 %v1765, %v1785
    %1790 = vrot.lane.b32.xlu0 %v1634, 112
    %v1791 = vpop.permute.xlu0 %1790
    %1792 = vrot.lane.b32.xlu0 %v1636, 112
    %v1793 = vpop.permute.xlu0 %1792
    %1794 = vrot.lane.b32.xlu0 %v1635, 112
    %v1795 = vpop.permute.xlu0 %1794
    %1796 = vrot.lane.b32.xlu0 %v1637, 112
    %v1797 = vpop.permute.xlu0 %1796
    %v1798 = vsel %vm252, %v1791, %v1795
    %v1799 = vsel %vm252, %v1793, %v1797
    %v1800 = vsel %vm252, %v1795, %v1791
    %v1801 = vsel %vm252, %v1797, %v1793
    %v1802 = vld [vmem:[%s846] sm:$0xff]
    %v1803 = vld [vmem:[%s846 + $0x8] sm:$0xff]
    %v1804 = vld [vmem:[%s846 + $0x10] sm:$0xf]
    %v1805 = vld [vmem:[%s846 + $0x18] sm:$0xf]
    %v1806 = vmul.f32 %v1798, %v1802
    %v1807 = vmul.f32 %v1800, %v1803
    %v1808 = vmul.f32 %v1799, %v1804
    %v1809 = vmul.f32 %v1801, %v1805
    %v1810 = vadd.f32 %v1786, %v1806
    %v1811 = vadd.f32 %v1787, %v1807
    %v1812 = vadd.f32 %v1788, %v1808
    %v1813 = vadd.f32 %v1789, %v1809
    %1814 = vrot.lane.b32.xlu0 %v1634, 111
    %v1815 = vpop.permute.xlu0 %1814
    %1816 = vrot.lane.b32.xlu0 %v1636, 111
    %v1817 = vpop.permute.xlu0 %1816
    %1818 = vrot.lane.b32.xlu0 %v1635, 111
    %v1819 = vpop.permute.xlu0 %1818
    %1820 = vrot.lane.b32.xlu0 %v1637, 111
    %v1821 = vpop.permute.xlu0 %1820
    %v1822 = vsel %vm280, %v1815, %v1819
    %v1823 = vsel %vm280, %v1817, %v1821
    %v1824 = vsel %vm280, %v1819, %v1815
    %v1825 = vsel %vm280, %v1821, %v1817
    %v1826 = vld [vmem:[%s871] sm:$0xff]
    %v1827 = vld [vmem:[%s871 + $0x8] sm:$0xff]
    %v1828 = vld [vmem:[%s871 + $0x10] sm:$0xf]
    %v1829 = vld [vmem:[%s871 + $0x18] sm:$0xf]
    %v1830 = vmul.f32 %v1822, %v1826
    %v1831 = vmul.f32 %v1824, %v1827
    %v1832 = vmul.f32 %v1823, %v1828
    %v1833 = vmul.f32 %v1825, %v1829
    %v1834 = vadd.f32 %v1810, %v1830
    %v1835 = vadd.f32 %v1811, %v1831
    %v1836 = vadd.f32 %v1812, %v1832
    %v1837 = vadd.f32 %v1813, %v1833
    %v1838 = vld [vmem:[%s884] sm:$0xff]
    %v1839 = vld [vmem:[%s884 + $0x8] sm:$0xff]
    %v1840 = vld [vmem:[%s884 + $0x10] sm:$0xff]
    %v1841 = vld [vmem:[%s884 + $0x18] sm:$0xff]
    %v1842 = vld [vmem:[%s884 + $0x20] sm:$0xff]
    %v1843 = vld [vmem:[%s884 + $0x28] sm:$0xff]
    %1845 = vset.pattern.permute.xlu0 12
    %1846 = vperm.xlu0 %1845, %v1838
    %v1847 = vpop.permute.xlu0 %1846
    %1850 = vset.pattern.permute.xlu0 12
    %1851 = vperm.xlu0 %1850, %v1839
    %v1852 = vpop.permute.xlu0 %1851
    %1855 = vset.pattern.permute.xlu0 12
    %1856 = vperm.xlu0 %1855, %v1840
    %v1857 = vpop.permute.xlu0 %1856
    %1860 = vset.pattern.permute.xlu0 12
    %1861 = vperm.xlu0 %1860, %v1841
    %v1862 = vpop.permute.xlu0 %1861
    %1865 = vset.pattern.permute.xlu0 12
    %1866 = vperm.xlu0 %1865, %v1842
    %v1867 = vpop.permute.xlu0 %1866
    %1870 = vset.pattern.permute.xlu0 12
    %1871 = vperm.xlu0 %1870, %v1843
    %v1872 = vpop.permute.xlu0 %1871
    %v1874 = vsel %vm605, %v1838, 0
    %v1876 = vsel %vm605, %v1839, 0
    %v1878 = vsel %vm605, %v1840, 0
    %v1880 = vsel %vm605, %v1841, 0
    %v1882 = vsel %vm605, %v1842, 0
    %v1884 = vsel %vm605, %v1843, 0
    %v1887 = vsel %vm99, %v1836, 0
    %v1890 = vsel %vm99, %v1837, 0
    %1892 = vmatpush.msra.mxu0 0.0
    %1893 = vmatpush.msra.mxu0 0.0
    %1894 = vmatpush.msra.mxu0 0.0
    %1895 = vmatpush.msra.mxu0 0.0
    %1896 = vmatpush.msra.mxu0 0.0
    %1897 = vmatpush.msra.mxu0 0.0
    %1898 = vmatpush.msra.mxu0 0.0
    %1899 = vmatpush.msra.mxu0 0.0
    %1900 = vmatpush.msra.mxu0 0.0
    %1901 = vmatpush.msra.mxu0 0.0
    %1902 = vmatpush.msra.mxu0 0.0
    %1903 = vmatpush.msra.mxu0 0.0
    %1904 = vmatpush.msra.mxu0 0.0
    %1905 = vmatpush.msra.mxu0 0.0
    %1906 = vmatpush.msra.mxu0 %v1887
    %1907 = vmatpush.msra.mxu0 %v1834
    %1908 = vmatmul.f32.gmra.mxu0 %v1874
    %v1909 = vpop.f32.mrf.mxu0
    %v1910 = vadd.f32 %v1847, %v1909
    %1911 = vmatmul.f32.gmra.mxu0 %v1876
    %v1912 = vpop.f32.mrf.mxu0
    %v1913 = vadd.f32 %v1852, %v1912
    %1914 = vmatmul.f32.gmra.mxu0 %v1878
    %v1915 = vpop.f32.mrf.mxu0
    %v1916 = vadd.f32 %v1857, %v1915
    %1917 = vmatmul.f32.gmra.mxu0 %v1880
    %v1918 = vpop.f32.mrf.mxu0
    %v1919 = vadd.f32 %v1862, %v1918
    %1920 = vmatmul.f32.gmra.mxu0 %v1882
    %v1921 = vpop.f32.mrf.mxu0
    %v1922 = vadd.f32 %v1867, %v1921
    %1923 = vmatmul.f32.gmra.mxu0 %v1884
    %v1924 = vpop.f32.mrf.mxu0
    %v1925 = vadd.f32 %v1872, %v1924
    %1926 = vdwg.mxu0
    %1927 = vmatpush.msra.mxu0 0.0
    %1928 = vmatpush.msra.mxu0 0.0
    %1929 = vmatpush.msra.mxu0 0.0
    %1930 = vmatpush.msra.mxu0 0.0
    %1931 = vmatpush.msra.mxu0 0.0
    %1932 = vmatpush.msra.mxu0 0.0
    %1933 = vmatpush.msra.mxu0 0.0
    %1934 = vmatpush.msra.mxu0 0.0
    %1935 = vmatpush.msra.mxu0 0.0
    %1936 = vmatpush.msra.mxu0 0.0
    %1937 = vmatpush.msra.mxu0 0.0
    %1938 = vmatpush.msra.mxu0 0.0
    %1939 = vmatpush.msra.mxu0 0.0
    %1940 = vmatpush.msra.mxu0 0.0
    %1941 = vmatpush.msra.mxu0 %v1890
    %1942 = vmatpush.msra.mxu0 %v1835
    %1943 = vmatmul.f32.gmra.mxu0 %v1874
    %v1944 = vpop.f32.mrf.mxu0
    %v1945 = vadd.f32 %v1847, %v1944
    %1946 = vmatmul.f32.gmra.mxu0 %v1876
    %v1947 = vpop.f32.mrf.mxu0
    %v1948 = vadd.f32 %v1852, %v1947
    %1949 = vmatmul.f32.gmra.mxu0 %v1878
    %v1950 = vpop.f32.mrf.mxu0
    %v1951 = vadd.f32 %v1857, %v1950
    %1952 = vmatmul.f32.gmra.mxu0 %v1880
    %v1953 = vpop.f32.mrf.mxu0
    %v1954 = vadd.f32 %v1862, %v1953
    %1955 = vmatmul.f32.gmra.mxu0 %v1882
    %v1956 = vpop.f32.mrf.mxu0
    %v1957 = vadd.f32 %v1867, %v1956
    %1958 = vmatmul.f32.gmra.mxu0 %v1884
    %v1959 = vpop.f32.mrf.mxu0
    %v1960 = vadd.f32 %v1872, %v1959
    %1961 = vdwg.mxu0
    %vm1962 = vcmp.ge.f32.partialorder %v1910, 0.0
    %vm1963 = vcmp.ge.f32.partialorder %v1945, 0.0
    %vm1964 = vcmp.ge.f32.partialorder %v1913, 0.0
    %vm1965 = vcmp.ge.f32.partialorder %v1948, 0.0
    %vm1966 = vcmp.ge.f32.partialorder %v1916, 0.0
    %vm1967 = vcmp.ge.f32.partialorder %v1951, 0.0
    %vm1968 = vcmp.ge.f32.partialorder %v1919, 0.0
    %vm1969 = vcmp.ge.f32.partialorder %v1954, 0.0
    %vm1970 = vcmp.ge.f32.partialorder %v1922, 0.0
    %vm1971 = vcmp.ge.f32.partialorder %v1957, 0.0
    %vm1972 = vcmp.ge.f32.partialorder %v1925, 0.0
    %vm1973 = vcmp.ge.f32.partialorder %v1960, 0.0
    %s1974 = sld [smem:[#allocation2 + $0x2]]
    %v1975 = vstv %s1974
    %v1976 = vmul.f32 %v1975, %v1910
    %v1977 = vmul.f32 %v1975, %v1945
    %v1978 = vmul.f32 %v1975, %v1913
    %v1979 = vmul.f32 %v1975, %v1948
    %v1980 = vmul.f32 %v1975, %v1916
    %v1981 = vmul.f32 %v1975, %v1951
    %v1982 = vmul.f32 %v1975, %v1919
    %v1983 = vmul.f32 %v1975, %v1954
    %v1984 = vmul.f32 %v1975, %v1922
    %v1985 = vmul.f32 %v1975, %v1957
    %v1986 = vmul.f32 %v1975, %v1925
    %v1987 = vmul.f32 %v1975, %v1960
    %v1988 = vsel %vm1962, %v1910, %v1976
    %v1989 = vsel %vm1963, %v1945, %v1977
    %v1990 = vsel %vm1964, %v1913, %v1978
    %v1991 = vsel %vm1965, %v1948, %v1979
    %v1992 = vsel %vm1966, %v1916, %v1980
    %v1993 = vsel %vm1967, %v1951, %v1981
    %v1994 = vsel %vm1968, %v1919, %v1982
    %v1995 = vsel %vm1969, %v1954, %v1983
    %v1996 = vsel %vm1970, %v1922, %v1984
    %v1997 = vsel %vm1971, %v1957, %v1985
    %v1998 = vsel %vm1972, %v1925, %v1986
    %v1999 = vsel %vm1973, %v1960, %v1987
    %s2000 = scalar_lea.vmem %s6, 96
    %2001 = vst [vmem:[%s2000] sm:$0xff] %v1988
    %2002 = vst [vmem:[%s2000 + $0x8] sm:$0xff] %v1989
    %2003 = vst [vmem:[%s2000 + $0x10] sm:$0xff] %v1990
    %2004 = vst [vmem:[%s2000 + $0x18] sm:$0xff] %v1991
    %2005 = vst [vmem:[%s2000 + $0x20] sm:$0xff] %v1992
    %2006 = vst [vmem:[%s2000 + $0x28] sm:$0xff] %v1993
    %2007 = vst [vmem:[%s2000 + $0x30] sm:$0xff] %v1994
    %2008 = vst [vmem:[%s2000 + $0x38] sm:$0xff] %v1995
    %2009 = vst [vmem:[%s2000 + $0x40] sm:$0xff] %v1996
    %2010 = vst [vmem:[%s2000 + $0x48] sm:$0xff] %v1997
    %2011 = vst [vmem:[%s2000 + $0x50] sm:$0xff] %v1998
    %2012 = vst [vmem:[%s2000 + $0x58] sm:$0xff] %v1999
    // Predicated region
    $region38: #{block2_pallas.1} parent=1 // pred_check
      _
    $region39: #{block2_pallas.1} parent=1 // pred_check_branch
      %2014 = sbr.rel (0) target = $region41
    $region40: #{block2_pallas.1} parent=1 // pred_region
      _
    $region41: #{block2_pallas.1} parent=1 // pred_fallthru
      _
    // Predicated region
    $region42: #{block2_pallas.1} parent=1 // pred_check
      _
    $region43: #{block2_pallas.1} parent=1 // pred_check_branch
      %2016 = sbr.rel (0) target = $region45
    $region44: #{block2_pallas.1} parent=1 // pred_region
      _
    $region45: #{block2_pallas.1} parent=1 // pred_fallthru
      _
    %2017 = vsyncpa [#allocation3], 1
    %2018 = vsyncpa [#allocation7], 1
    %2019 = vsyncpa [#allocation4], 1

</llo_original>
